<compile_context>
chip_gen: v7x
topology: tpu7x:2x2x1
jax: 0.10.0
libtpu: 0.0.40
codegen_flags: <defaults>
</compile_context>

<pallas_src>
import functools

import jax
import jax.numpy as jnp
from jax.experimental import pallas as pl
from jax.experimental.pallas import tpu as pltpu

HID = 256
AGENT_DIM = 3
NEIGHBOR_DIM = 6
OUT_DIM = 1


# --------------------------------------------------------------------------- kernel
def _critic_kernel(x_ref, w1_ref, wn2_ref, wn3_ref, wm1_ref, misc_ref, out_ref,
                   *, n_neighbors, ew_dtype):
    f32 = jnp.float32
    bf16 = jnp.bfloat16
    ew = ew_dtype

    misc = misc_ref[...]                       # [5, 256] (ew dtype)
    bn2 = misc[0:1, :]
    bn3n = misc[1:2, :]                        # == n_neighbors * bn3 (precomputed)
    bm1 = misc[2:3, :]
    wm2t = misc[3:4, :]
    bm2 = misc[4:5, 0:1].astype(f32)

    # Fused layer 1: agent Linear(3,256) + all N neighbor Linear(6,256) + all
    # their biases in ONE matmul (ones column in x carries the biases).
    z = jnp.dot(x_ref[...].astype(bf16), w1_ref[...],
                preferred_element_type=f32).astype(ew)   # [tb, (N+1)*256]

    a = z[:, :HID]                             # agent embedding — NO ReLU (matches ref)

    # Per-neighbor: ReLU -> Linear(256,256) -> bias -> ReLU, accumulated.
    # Chunks are 256-lane aligned slices; N is tiny -> static unroll.
    wn2 = wn2_ref[...]
    if n_neighbors == 0:
        hs = jnp.zeros(a.shape, ew)
    else:
        hs = None
        for n in range(n_neighbors):
            c0 = (n + 1) * HID
            h1 = jnp.maximum(z[:, c0:c0 + HID], 0.0).astype(bf16)
            h2 = jnp.dot(h1, wn2, preferred_element_type=f32).astype(ew) + bn2
            h2 = jnp.maximum(h2, 0.0)
            hs = h2 if hs is None else hs + h2     # init from first slice, no zero-fill

    # Third neighbor Linear AFTER the sum (linearity of wn3); bias = N*bn3.
    x = jnp.dot(hs.astype(bf16), wn3_ref[...],
                preferred_element_type=f32).astype(ew) + bn3n + a

    # Head: ReLU -> Linear(256,256) -> ReLU -> Linear(256,1).
    h = jnp.maximum(x, 0.0)
    h = jnp.dot(h.astype(bf16), wm1_ref[...],
                preferred_element_type=f32).astype(ew) + bm1
    h = jnp.maximum(h, 0.0)

    # Final Linear(256,1) as VPU multiply + XLU lane-reduce (f32 reduction).
    y = jnp.sum((h * wm2t).astype(f32), axis=-1, keepdims=True) + bm2
    out_ref[...] = y.astype(out_ref.dtype)


# --------------------------------------------------------------------------- params
def _linear_init(key, fan_in, fan_out):
    """torch.nn.Linear default init: U(-1/sqrt(fan_in), 1/sqrt(fan_in))."""
    kw, kb = jax.random.split(key)
    bound = 1.0 / jnp.sqrt(jnp.asarray(fan_in, jnp.float32))
    w = jax.random.uniform(kw, (fan_in, fan_out), jnp.float32, -bound, bound)
    b = jax.random.uniform(kb, (1, fan_out), jnp.float32, -bound, bound)
    return w, b


def init_params(key):
    ks = jax.random.split(key, 6)
    wn1, bn1 = _linear_init(ks[0], NEIGHBOR_DIM, HID)
    wn2, bn2 = _linear_init(ks[1], HID, HID)
    wn3, bn3 = _linear_init(ks[2], HID, HID)
    wa, ba = _linear_init(ks[3], AGENT_DIM, HID)
    wm1, bm1 = _linear_init(ks[4], HID, HID)
    wm2, bm2 = _linear_init(ks[5], HID, OUT_DIM)
    return (wn1, bn1, wn2, bn2, wn3, bn3, wa, ba, wm1, bm1, wm2, bm2)


def _elementwise_dtype():
    """bf16 elementwise chain on v6e/v7x (VALU-bound there); f32 on v5e and
    older generations whose VPU has no bf16 path."""
    try:
        kind = jax.devices()[0].device_kind.lower()
    except Exception:
        return jnp.float32
    for old in ("v2", "v3", "v4", "v5"):
        if old in kind:
            return jnp.float32
    return jnp.bfloat16


def prepare_params(params, n_neighbors, ew_dtype=None):
    """One-time (per n_neighbors) packing: block-diagonal bf16 layer-1 weight
    with biases folded in, bf16 hidden weights, and a single [5,256] misc
    array holding bn2, N*bn3, bm1, wm2^T and bm2."""
    if ew_dtype is None:
        ew_dtype = _elementwise_dtype()
    (wn1, bn1, wn2, bn2, wn3, bn3, wa, ba, wm1, bm1, wm2, bm2) = params
    n = n_neighbors
    kin = AGENT_DIM + n * NEIGHBOR_DIM + 1               # +1 = ones column (biases)

    w1 = jnp.zeros((kin, (n + 1) * HID), jnp.float32)
    w1 = w1.at[:AGENT_DIM, :HID].set(wa)                 # agent block -> chunk 0
    w1 = w1.at[kin - 1, :HID].set(ba[0])
    for i in range(n):
        r0 = AGENT_DIM + i * NEIGHBOR_DIM
        c0 = (i + 1) * HID
        w1 = w1.at[r0:r0 + NEIGHBOR_DIM, c0:c0 + HID].set(wn1)
        w1 = w1.at[kin - 1, c0:c0 + HID].set(bn1[0])

    bm2_row = jnp.zeros((HID,), jnp.float32).at[0].set(bm2[0, 0])
    misc = jnp.stack([bn2[0],
                      jnp.float32(n) * bn3[0],           # summed bn3, precomputed
                      bm1[0],
                      wm2.reshape(HID),
                      bm2_row]).astype(ew_dtype)

    bf16 = jnp.bfloat16
    return {
        "n_neighbors": n,
        "ew_dtype": ew_dtype,
        "w1": w1.astype(bf16),
        "wn2": wn2.astype(bf16),
        "wn3": wn3.astype(bf16),
        "wm1": wm1.astype(bf16),
        "misc": misc,
    }


# --------------------------------------------------------------------------- tiling
def _round_up(x, m):
    return ((x + m - 1) // m) * m


def _round_down(x, m):
    return (x // m) * m


def _pick_batch_tile(batch, n_neighbors):
    """Batch-row tile: large enough to amortize the ~0.35us/step grid overhead,
    small enough for v7x's 64 MiB VMEM (N-aware budget), and picked so medium
    and large batches get >=2 grid steps (v7x megacore + pipelining)."""
    # rough per-row VMEM bytes: double-buffered lane-padded input (2*512) +
    # f32/ew layer-1 slab ((N+1)*1024) + a handful of [*,256] temporaries.
    bytes_per_row = 2 * 512 + (n_neighbors + 1) * 1024 + 6 * 1024
    max_tile = min(1024, max(128, _round_down((24 << 20) // bytes_per_row, 8)))
    if batch <= 2 * max_tile:
        tb = max(128, _round_up(-(-batch // 2), 8))      # ~B/2, >=2 steps once B>256
        tb = min(tb, max_tile)
    else:
        tb = max_tile
    return tb


# --------------------------------------------------------------------------- wrapper
def critic_forward(s, prepared):
    """s: [B, 3 + N*6] float32 (or 1-D [3 + N*6]). Returns [B, 1] float32."""
    if s.ndim == 1:
        return critic_forward(s[None, :], prepared)[0]

    s = s.astype(jnp.float32)
    b = s.shape[0]
    n = prepared["n_neighbors"]
    kin = AGENT_DIM + n * NEIGHBOR_DIM + 1
    assert s.shape[1] == kin - 1, (
        f"state has {s.shape[1]} features, prepared params expect {kin - 1}")

    tb = _pick_batch_tile(b, n)
    b_pad = _round_up(b, tb)

    # contiguous slab + ones column (carries the folded biases); pad rows to tile.
    x = jnp.concatenate([s, jnp.ones((b, 1), jnp.float32)], axis=1)
    if b_pad != b:
        x = jnp.pad(x, ((0, b_pad - b), (0, 0)))

    w1 = prepared["w1"]
    wn2 = prepared["wn2"]
    wn3 = prepared["wn3"]
    wm1 = prepared["wm1"]
    misc = prepared["misc"]

    kernel = functools.partial(_critic_kernel, n_neighbors=n,
                               ew_dtype=prepared["ew_dtype"])

    row_map = lambda i: (i, 0)
    const_map = lambda i: (0, 0)          # weights stay VMEM-resident across steps

    out = pl.pallas_call(
        kernel,
        out_shape=jax.ShapeDtypeStruct((b_pad, OUT_DIM), jnp.float32),
        grid=(b_pad // tb,),
        in_specs=[
            pl.BlockSpec((tb, kin), row_map),            # activations, tiled on B
            pl.BlockSpec(w1.shape, const_map),
            pl.BlockSpec(wn2.shape, const_map),
            pl.BlockSpec(wn3.shape, const_map),
            pl.BlockSpec(wm1.shape, const_map),
            pl.BlockSpec(misc.shape, const_map),
        ],
        out_specs=pl.BlockSpec((tb, OUT_DIM), row_map),
        compiler_params=pltpu.CompilerParams(
            dimension_semantics=("parallel",),           # split tiles across TCs (v7x)
            vmem_limit_bytes=48 * 1024 * 1024,
        ),
    )(x, w1, wn2, wn3, wm1, misc)
    return out[:b]


# --------------------------------------------------------------------------- reference
def _reference_forward(s, params):
    """Pure-JAX f32 reference mirroring the PyTorch module (per-neighbor wn3,
    then sum — mathematically identical to the fused kernel)."""
    (wn1, bn1, wn2, bn2, wn3, bn3, wa, ba, wm1, bm1, wm2, bm2) = params
    b = s.shape[0]
    agent = s[:, :AGENT_DIM]
    neighbors = s[:, AGENT_DIM:].reshape(b, -1, NEIGHBOR_DIM)
    h = jnp.maximum(neighbors @ wn1 + bn1[0], 0.0)
    h = jnp.maximum(h @ wn2 + bn2[0], 0.0)
    h = h @ wn3 + bn3[0]
    x = h.sum(axis=1)
    x = x + (agent @ wa + ba[0])
    h2 = jnp.maximum(x, 0.0)
    h2 = jnp.maximum(h2 @ wm1 + bm1[0], 0.0)
    return h2 @ wm2 + bm2[0]


if __name__ == "__main__":
    key = jax.random.PRNGKey(0)
    k_param, k_data = jax.random.split(key)

    params = init_params(k_param)

    B, N = 8, 4   # NOTE: at this size the kernel is fixed-overhead bound;
                  # throughput comes from batching more agents per call.
    s = jax.random.normal(k_data, (B, AGENT_DIM + N * NEIGHBOR_DIM), jnp.float32)

    prepared = prepare_params(params, n_neighbors=N)     # one-time bf16 packing

    y = critic_forward(s, prepared)
    y = jax.block_until_ready(y)

    y_ref = _reference_forward(s, params)
    assert y.shape == (B, OUT_DIM)
    # bf16 matmul operands (and bf16 elementwise on v6e/v7x) vs f32 reference.
    assert jnp.allclose(y, y_ref, atol=5e-2, rtol=5e-2), \
        f"mismatch vs JAX reference: max abs diff {jnp.max(jnp.abs(y - y_ref))}"

    print("KERNEL_OK")
</pallas_src>

<mosaic_0001>
module attributes {stable_mosaic.version = 11 : i64} {
  func.func @_critic_kernel(%arg0: i32, %arg1: memref<128x28xf32, #tpu.memory_space<vmem>>, %arg2: memref<28x1280xbf16, #tpu.memory_space<vmem>>, %arg3: memref<256x256xbf16, #tpu.memory_space<vmem>>, %arg4: memref<256x256xbf16, #tpu.memory_space<vmem>>, %arg5: memref<256x256xbf16, #tpu.memory_space<vmem>>, %arg6: memref<5x256xbf16, #tpu.memory_space<vmem>>, %arg7: memref<128x1xf32, #tpu.memory_space<vmem>>) attributes {dimension_semantics = [#tpu.dimension_semantics<parallel>], iteration_bounds = array<i64: 1>, scalar_prefetch = 0 : i64, scratch_operands = 0 : i64, tpu.core_type = #tpu.core_type<tc>, window_params = [{transform_indices = @transform_0, window_bounds = array<i64: 128, 28>}, {pipeline_mode = #tpu.pipeline_mode<synchronous>, transform_indices = @transform_1, window_bounds = array<i64: 28, 1280>}, {pipeline_mode = #tpu.pipeline_mode<synchronous>, transform_indices = @transform_2, window_bounds = array<i64: 256, 256>}, {pipeline_mode = #tpu.pipeline_mode<synchronous>, transform_indices = @transform_3, window_bounds = array<i64: 256, 256>}, {pipeline_mode = #tpu.pipeline_mode<synchronous>, transform_indices = @transform_4, window_bounds = array<i64: 256, 256>}, {pipeline_mode = #tpu.pipeline_mode<synchronous>, transform_indices = @transform_5, window_bounds = array<i64: 5, 256>}, {transform_indices = @transform_6, window_bounds = array<i64: 128, 1>}]} {
    %c0 = arith.constant 0 : index
    %c0_0 = arith.constant 0 : index
    %0 = vector.load %arg6[%c0, %c0_0] : memref<5x256xbf16, #tpu.memory_space<vmem>>, vector<5x256xbf16>
    %1 = vector.extract_strided_slice %0 {offsets = [0, 0], sizes = [1, 256], strides = [1, 1]} : vector<5x256xbf16> to vector<1x256xbf16>
    %2 = vector.extract_strided_slice %0 {offsets = [1, 0], sizes = [1, 256], strides = [1, 1]} : vector<5x256xbf16> to vector<1x256xbf16>
    %3 = vector.extract_strided_slice %0 {offsets = [2, 0], sizes = [1, 256], strides = [1, 1]} : vector<5x256xbf16> to vector<1x256xbf16>
    %4 = vector.extract_strided_slice %0 {offsets = [3, 0], sizes = [1, 256], strides = [1, 1]} : vector<5x256xbf16> to vector<1x256xbf16>
    %5 = vector.extract_strided_slice %0 {offsets = [4, 0], sizes = [1, 1], strides = [1, 1]} : vector<5x256xbf16> to vector<1x1xbf16>
    %6 = arith.extf %5 : vector<1x1xbf16> to vector<1x1xf32>
    %c0_1 = arith.constant 0 : index
    %c0_2 = arith.constant 0 : index
    %7 = vector.load %arg1[%c0_1, %c0_2] : memref<128x28xf32, #tpu.memory_space<vmem>>, vector<128x28xf32>
    %8 = arith.truncf %7 : vector<128x28xf32> to vector<128x28xbf16>
    %c0_3 = arith.constant 0 : index
    %c0_4 = arith.constant 0 : index
    %9 = vector.load %arg2[%c0_3, %c0_4] : memref<28x1280xbf16, #tpu.memory_space<vmem>>, vector<28x1280xbf16>
    %cst = arith.constant dense<0.000000e+00> : vector<128x1280xf32>
    %10 = tpu.matmul %8, %9, %cst {dimension_numbers = #tpu.dot_dimension_numbers<[1], [0], [0], [1], [0, 0, 1, 1], [], []>} : vector<128x28xbf16>, vector<28x1280xbf16>, vector<128x1280xf32> -> vector<128x1280xf32>
    %11 = arith.truncf %10 : vector<128x1280xf32> to vector<128x1280xbf16>
    %12 = vector.extract_strided_slice %11 {offsets = [0, 0], sizes = [128, 256], strides = [1, 1]} : vector<128x1280xbf16> to vector<128x256xbf16>
    %c0_5 = arith.constant 0 : index
    %c0_6 = arith.constant 0 : index
    %13 = vector.load %arg3[%c0_5, %c0_6] : memref<256x256xbf16, #tpu.memory_space<vmem>>, vector<256x256xbf16>
    %14 = vector.extract_strided_slice %11 {offsets = [0, 256], sizes = [128, 256], strides = [1, 1]} : vector<128x1280xbf16> to vector<128x256xbf16>
    %cst_7 = arith.constant 0.000000e+00 : bf16
    %15 = vector.broadcast %cst_7 : bf16 to vector<128x256xbf16>
    %16 = arith.maximumf %14, %15 : vector<128x256xbf16>
    %cst_8 = arith.constant dense<0.000000e+00> : vector<128x256xf32>
    %17 = tpu.matmul %16, %13, %cst_8 {dimension_numbers = #tpu.dot_dimension_numbers<[1], [0], [0], [1], [0, 0, 1, 1], [], []>} : vector<128x256xbf16>, vector<256x256xbf16>, vector<128x256xf32> -> vector<128x256xf32>
    %18 = arith.truncf %17 : vector<128x256xf32> to vector<128x256xbf16>
    %19 = vector.broadcast %1 : vector<1x256xbf16> to vector<128x256xbf16>
    %20 = arith.addf %18, %19 : vector<128x256xbf16>
    %cst_9 = arith.constant 0.000000e+00 : bf16
    %21 = vector.broadcast %cst_9 : bf16 to vector<128x256xbf16>
    %22 = arith.maximumf %20, %21 : vector<128x256xbf16>
    %23 = vector.extract_strided_slice %11 {offsets = [0, 512], sizes = [128, 256], strides = [1, 1]} : vector<128x1280xbf16> to vector<128x256xbf16>
    %cst_10 = arith.constant 0.000000e+00 : bf16
    %24 = vector.broadcast %cst_10 : bf16 to vector<128x256xbf16>
    %25 = arith.maximumf %23, %24 : vector<128x256xbf16>
    %cst_11 = arith.constant dense<0.000000e+00> : vector<128x256xf32>
    %26 = tpu.matmul %25, %13, %cst_11 {dimension_numbers = #tpu.dot_dimension_numbers<[1], [0], [0], [1], [0, 0, 1, 1], [], []>} : vector<128x256xbf16>, vector<256x256xbf16>, vector<128x256xf32> -> vector<128x256xf32>
    %27 = arith.truncf %26 : vector<128x256xf32> to vector<128x256xbf16>
    %28 = vector.broadcast %1 : vector<1x256xbf16> to vector<128x256xbf16>
    %29 = arith.addf %27, %28 : vector<128x256xbf16>
    %cst_12 = arith.constant 0.000000e+00 : bf16
    %30 = vector.broadcast %cst_12 : bf16 to vector<128x256xbf16>
    %31 = arith.maximumf %29, %30 : vector<128x256xbf16>
    %32 = arith.addf %22, %31 : vector<128x256xbf16>
    %33 = vector.extract_strided_slice %11 {offsets = [0, 768], sizes = [128, 256], strides = [1, 1]} : vector<128x1280xbf16> to vector<128x256xbf16>
    %cst_13 = arith.constant 0.000000e+00 : bf16
    %34 = vector.broadcast %cst_13 : bf16 to vector<128x256xbf16>
    %35 = arith.maximumf %33, %34 : vector<128x256xbf16>
    %cst_14 = arith.constant dense<0.000000e+00> : vector<128x256xf32>
    %36 = tpu.matmul %35, %13, %cst_14 {dimension_numbers = #tpu.dot_dimension_numbers<[1], [0], [0], [1], [0, 0, 1, 1], [], []>} : vector<128x256xbf16>, vector<256x256xbf16>, vector<128x256xf32> -> vector<128x256xf32>
    %37 = arith.truncf %36 : vector<128x256xf32> to vector<128x256xbf16>
    %38 = vector.broadcast %1 : vector<1x256xbf16> to vector<128x256xbf16>
    %39 = arith.addf %37, %38 : vector<128x256xbf16>
    %cst_15 = arith.constant 0.000000e+00 : bf16
    %40 = vector.broadcast %cst_15 : bf16 to vector<128x256xbf16>
    %41 = arith.maximumf %39, %40 : vector<128x256xbf16>
    %42 = arith.addf %32, %41 : vector<128x256xbf16>
    %43 = vector.extract_strided_slice %11 {offsets = [0, 1024], sizes = [128, 256], strides = [1, 1]} : vector<128x1280xbf16> to vector<128x256xbf16>
    %cst_16 = arith.constant 0.000000e+00 : bf16
    %44 = vector.broadcast %cst_16 : bf16 to vector<128x256xbf16>
    %45 = arith.maximumf %43, %44 : vector<128x256xbf16>
    %cst_17 = arith.constant dense<0.000000e+00> : vector<128x256xf32>
    %46 = tpu.matmul %45, %13, %cst_17 {dimension_numbers = #tpu.dot_dimension_numbers<[1], [0], [0], [1], [0, 0, 1, 1], [], []>} : vector<128x256xbf16>, vector<256x256xbf16>, vector<128x256xf32> -> vector<128x256xf32>
    %47 = arith.truncf %46 : vector<128x256xf32> to vector<128x256xbf16>
    %48 = vector.broadcast %1 : vector<1x256xbf16> to vector<128x256xbf16>
    %49 = arith.addf %47, %48 : vector<128x256xbf16>
    %cst_18 = arith.constant 0.000000e+00 : bf16
    %50 = vector.broadcast %cst_18 : bf16 to vector<128x256xbf16>
    %51 = arith.maximumf %49, %50 : vector<128x256xbf16>
    %52 = arith.addf %42, %51 : vector<128x256xbf16>
    %c0_19 = arith.constant 0 : index
    %c0_20 = arith.constant 0 : index
    %53 = vector.load %arg4[%c0_19, %c0_20] : memref<256x256xbf16, #tpu.memory_space<vmem>>, vector<256x256xbf16>
    %cst_21 = arith.constant dense<0.000000e+00> : vector<128x256xf32>
    %54 = tpu.matmul %52, %53, %cst_21 {dimension_numbers = #tpu.dot_dimension_numbers<[1], [0], [0], [1], [0, 0, 1, 1], [], []>} : vector<128x256xbf16>, vector<256x256xbf16>, vector<128x256xf32> -> vector<128x256xf32>
    %55 = arith.truncf %54 : vector<128x256xf32> to vector<128x256xbf16>
    %56 = vector.broadcast %2 : vector<1x256xbf16> to vector<128x256xbf16>
    %57 = arith.addf %55, %56 : vector<128x256xbf16>
    %58 = arith.addf %57, %12 : vector<128x256xbf16>
    %cst_22 = arith.constant 0.000000e+00 : bf16
    %59 = vector.broadcast %cst_22 : bf16 to vector<128x256xbf16>
    %60 = arith.maximumf %58, %59 : vector<128x256xbf16>
    %c0_23 = arith.constant 0 : index
    %c0_24 = arith.constant 0 : index
    %61 = vector.load %arg5[%c0_23, %c0_24] : memref<256x256xbf16, #tpu.memory_space<vmem>>, vector<256x256xbf16>
    %cst_25 = arith.constant dense<0.000000e+00> : vector<128x256xf32>
    %62 = tpu.matmul %60, %61, %cst_25 {dimension_numbers = #tpu.dot_dimension_numbers<[1], [0], [0], [1], [0, 0, 1, 1], [], []>} : vector<128x256xbf16>, vector<256x256xbf16>, vector<128x256xf32> -> vector<128x256xf32>
    %63 = arith.truncf %62 : vector<128x256xf32> to vector<128x256xbf16>
    %64 = vector.broadcast %3 : vector<1x256xbf16> to vector<128x256xbf16>
    %65 = arith.addf %63, %64 : vector<128x256xbf16>
    %cst_26 = arith.constant 0.000000e+00 : bf16
    %66 = vector.broadcast %cst_26 : bf16 to vector<128x256xbf16>
    %67 = arith.maximumf %65, %66 : vector<128x256xbf16>
    %68 = vector.broadcast %4 : vector<1x256xbf16> to vector<128x256xbf16>
    %69 = arith.mulf %67, %68 : vector<128x256xbf16>
    %70 = arith.extf %69 : vector<128x256xbf16> to vector<128x256xf32>
    %cst_27 = arith.constant dense<0.000000e+00> : vector<128xf32>
    %71 = vector.multi_reduction <add>, %70, %cst_27 [1] : vector<128x256xf32> to vector<128xf32>
    %72 = vector.shape_cast %71 : vector<128xf32> to vector<128x1xf32>
    %73 = vector.broadcast %6 : vector<1x1xf32> to vector<128x1xf32>
    %74 = arith.addf %72, %73 : vector<128x1xf32>
    %c0_28 = arith.constant 0 : index
    %c0_29 = arith.constant 0 : index
    %75 = vector.load %arg7[%c0_28, %c0_29] : memref<128x1xf32, #tpu.memory_space<vmem>>, vector<128x1xf32>
    tpu.vector_store %arg7[%c0_28, %c0_29], %74 {strides = array<i32>} : memref<128x1xf32, #tpu.memory_space<vmem>>, vector<128x1xf32>,
    return
  }
  func.func @transform_0(%arg0: i32) -> (i32, i32) {
    %c0_i32 = arith.constant 0 : i32
    %c0_i32_0 = arith.constant 0 : i32
    return %arg0, %c0_i32 : i32, i32
  }
  func.func @transform_1(%arg0: i32) -> (i32, i32) {
    %c0_i32 = arith.constant 0 : i32
    %c0_i32_0 = arith.constant 0 : i32
    %c0_i32_1 = arith.constant 0 : i32
    return %c0_i32, %c0_i32_0 : i32, i32
  }
  func.func @transform_2(%arg0: i32) -> (i32, i32) {
    %c0_i32 = arith.constant 0 : i32
    %c0_i32_0 = arith.constant 0 : i32
    %c0_i32_1 = arith.constant 0 : i32
    return %c0_i32, %c0_i32_0 : i32, i32
  }
  func.func @transform_3(%arg0: i32) -> (i32, i32) {
    %c0_i32 = arith.constant 0 : i32
    %c0_i32_0 = arith.constant 0 : i32
    %c0_i32_1 = arith.constant 0 : i32
    return %c0_i32, %c0_i32_0 : i32, i32
  }
  func.func @transform_4(%arg0: i32) -> (i32, i32) {
    %c0_i32 = arith.constant 0 : i32
    %c0_i32_0 = arith.constant 0 : i32
    %c0_i32_1 = arith.constant 0 : i32
    return %c0_i32, %c0_i32_0 : i32, i32
  }
  func.func @transform_5(%arg0: i32) -> (i32, i32) {
    %c0_i32 = arith.constant 0 : i32
    %c0_i32_0 = arith.constant 0 : i32
    %c0_i32_1 = arith.constant 0 : i32
    return %c0_i32, %c0_i32_0 : i32, i32
  }
  func.func @transform_6(%arg0: i32) -> (i32, i32) {
    %c0_i32 = arith.constant 0 : i32
    %c0_i32_0 = arith.constant 0 : i32
    return %arg0, %c0_i32 : i32, i32
  }
}

</mosaic_0001>

<llo_original>
// kernel: tpu_custom_call.1
$region0: #{tpu_custom_call.1}
  #allocation0 [shape = 'u32[]', space=smem, size = 0x4, offset = 0x4, fixed_abs, tag = 'smem constant byte address 0x4 - core index']
  #allocation1 [shape = 'u32[144,128]{1,0:T(1,128)}', space=vmem, size = 0x12000, scoped, tag = 'internal scratch']
  %s0 = inlined_call_operand.vmem [shape: f32[128,28], index: 0, kind: input, shape index: {}]
  %s1 = inlined_call_operand.vmem [shape: bf16[28,1280], index: 1, kind: input, shape index: {}]
  %s2 = inlined_call_operand.hbm [shape: bf16[256,256], index: 2, kind: input, shape index: {}]
  %s3 = inlined_call_operand.hbm [shape: bf16[256,256], index: 3, kind: input, shape index: {}]
  %s4 = inlined_call_operand.hbm [shape: bf16[256,256], index: 4, kind: input, shape index: {}]
  %s5 = inlined_call_operand.vmem [shape: bf16[5,256], index: 5, kind: input, shape index: {}]
  %s6 = inlined_call_operand.vmem [shape: f32[128,1], index: 6, kind: output, shape index: {}]
  %s7 = sld [smem:[#allocation0]]
  $region46: #{tpu_custom_call.1} parent=0
    _
  %s9 = ssub.s32 1, %s7
  %s10 = scalar_select 0, %s9, %s7
  $region1: #{tpu_custom_call.1} parent=0
    #allocation2 [shape = 'u8[131072]{0}', space=vmem, size = 0x20000, scoped, tag = 'input window, operand 2, single buffered']
    #allocation3 [shape = 's32[1]{0}', space=sflag, size = 0x4, scoped, tag = 'scoped memory for tpu_custom_call.1']
    #allocation4 [shape = 'u8[131072]{0}', space=vmem, size = 0x20000, scoped, tag = 'input window, operand 3, single buffered']
    #allocation5 [shape = 's32[1]{0}', space=sflag, size = 0x4, scoped, tag = 'scoped memory for tpu_custom_call.1']
    #allocation6 [shape = 'u8[131072]{0}', space=vmem, size = 0x20000, scoped, tag = 'input window, operand 4, single buffered']
    %11 = vsyncpa [#allocation3], 0
    %12 = vsyncpa [#allocation5], 0
    // Predicated region
    $region2: #{tpu_custom_call.1} parent=1 // pred_check
      _
    $region3: #{tpu_custom_call.1} parent=1 // pred_check_branch
      %14 = sbr.rel (0) target = $region5
    $region4: #{tpu_custom_call.1} parent=1 // pred_region
      _
    $region5: #{tpu_custom_call.1} parent=1 // pred_fallthru
      _
    // Predicated region
    $region6: #{tpu_custom_call.1} parent=1 // pred_check
      _
    $region7: #{tpu_custom_call.1} parent=1 // pred_check_branch
      %16 = sbr.rel (0) target = $region9
    $region8: #{tpu_custom_call.1} parent=1 // pred_region
      _
    $region9: #{tpu_custom_call.1} parent=1 // pred_fallthru
      _
    // Predicated region
    $region10: #{tpu_custom_call.1} parent=1 // pred_check
      _
    $region11: #{tpu_custom_call.1} parent=1 // pred_check_branch
      %18 = sbr.rel (0) target = $region13
    $region12: #{tpu_custom_call.1} parent=1 // pred_region
      %s20 = ssub.s32 4096, 4096
      %21 = vsyncadd [#allocation3], %s20
      %s22 = sshll.u32 [#allocation2], 4
      %s23 = int_to_ptr.vmem [resolvable:$true] %s22
      %28 = dma.hbm_to_vmem [thread:$0]  %s2, 4096, %s23, [#allocation3], 128, 128, 8
    $region13: #{tpu_custom_call.1} parent=1 // pred_fallthru
      _
    // Predicated region
    $region14: #{tpu_custom_call.1} parent=1 // pred_check
      _
    $region15: #{tpu_custom_call.1} parent=1 // pred_check_branch
      %30 = sbr.rel (0) target = $region17
    $region16: #{tpu_custom_call.1} parent=1 // pred_region
      %s32 = ssub.s32 4096, 4096
      %33 = vsyncadd [#allocation5], %s32
      %s34 = sshll.u32 [#allocation4], 4
      %s35 = int_to_ptr.vmem [resolvable:$true] %s34
      %40 = dma.hbm_to_vmem [thread:$0]  %s3, 4096, %s35, [#allocation5], 128, 128, 8
    $region17: #{tpu_custom_call.1} parent=1 // pred_fallthru
      _
    // Predicated region
    $region18: #{tpu_custom_call.1} parent=1 // pred_check
      _
    $region19: #{tpu_custom_call.1} parent=1 // pred_check_branch
      %42 = sbr.rel (0) target = $region21
    $region20: #{tpu_custom_call.1} parent=1 // pred_region
      %s44 = ssub.s32 4096, 4096
      %45 = vsyncadd [#allocation5], %s44
      %s46 = sshll.u32 [#allocation6], 4
      %s47 = int_to_ptr.vmem [resolvable:$true] %s46
      %52 = dma.hbm_to_vmem [thread:$0]  %s4, 4096, %s47, [#allocation5], 128, 128, 8
    $region21: #{tpu_custom_call.1} parent=1 // pred_fallthru
      _
    // Predicated region
    $region22: #{tpu_custom_call.1} parent=1 // pred_check
      _
    $region23: #{tpu_custom_call.1} parent=1 // pred_check_branch
      %54 = sbr.rel (0) target = $region25
    $region24: #{tpu_custom_call.1} parent=1 // pred_region
      _
    $region25: #{tpu_custom_call.1} parent=1 // pred_fallthru
      _
    // Predicated region
    $region26: #{tpu_custom_call.1} parent=1 // pred_check
      _
    $region27: #{tpu_custom_call.1} parent=1 // pred_check_branch
      %56 = sbr.rel (0) target = $region29
    $region28: #{tpu_custom_call.1} parent=1 // pred_region
      %57 = dma.done [#allocation3], 4096
    $region29: #{tpu_custom_call.1} parent=1 // pred_fallthru
      _
    // Predicated region
    $region30: #{tpu_custom_call.1} parent=1 // pred_check
      _
    $region31: #{tpu_custom_call.1} parent=1 // pred_check_branch
      %59 = sbr.rel (0) target = $region33
    $region32: #{tpu_custom_call.1} parent=1 // pred_region
      %60 = dma.done [#allocation5], 4096
    $region33: #{tpu_custom_call.1} parent=1 // pred_fallthru
      _
    // Predicated region
    $region34: #{tpu_custom_call.1} parent=1 // pred_check
      _
    $region35: #{tpu_custom_call.1} parent=1 // pred_check_branch
      %62 = sbr.rel (0) target = $region37
    $region36: #{tpu_custom_call.1} parent=1 // pred_region
      %63 = dma.done [#allocation5], 4096
    $region37: #{tpu_custom_call.1} parent=1 // pred_fallthru
      _
    %v65 = vld [vmem:[%s5] sm:$0x77]
    %v66 = vunpack.c.l.bf16 %v65
    %v67 = vld [vmem:[%s0] sm:$0xff]
    %v68 = vld [vmem:[%s0 + $0x8] sm:$0xff]
    %v69 = vld [vmem:[%s0 + $0x10] sm:$0xff]
    %v70 = vld [vmem:[%s0 + $0x18] sm:$0xff]
    %v71 = vld [vmem:[%s0 + $0x20] sm:$0xff]
    %v72 = vld [vmem:[%s0 + $0x28] sm:$0xff]
    %v73 = vld [vmem:[%s0 + $0x30] sm:$0xff]
    %v74 = vld [vmem:[%s0 + $0x38] sm:$0xff]
    %v75 = vld [vmem:[%s0 + $0x40] sm:$0xff]
    %v76 = vld [vmem:[%s0 + $0x48] sm:$0xff]
    %v77 = vld [vmem:[%s0 + $0x50] sm:$0xff]
    %v78 = vld [vmem:[%s0 + $0x58] sm:$0xff]
    %v79 = vld [vmem:[%s0 + $0x60] sm:$0xff]
    %v80 = vld [vmem:[%s0 + $0x68] sm:$0xff]
    %v81 = vld [vmem:[%s0 + $0x70] sm:$0xff]
    %v82 = vld [vmem:[%s0 + $0x78] sm:$0xff]
    %v83 = vpack.c.bf16 %v68, %v67
    %v84 = vpack.c.bf16 %v70, %v69
    %v85 = vpack.c.bf16 %v72, %v71
    %v86 = vpack.c.bf16 %v74, %v73
    %v87 = vpack.c.bf16 %v76, %v75
    %v88 = vpack.c.bf16 %v78, %v77
    %v89 = vpack.c.bf16 %v80, %v79
    %v90 = vpack.c.bf16 %v82, %v81
    %v91 = vld [vmem:[%s1] sm:$0xff]
    %v92 = vld [vmem:[%s1 + $0x8] sm:$0xff]
    %v93 = vld [vmem:[%s1 + $0x10] sm:$0xff]
    %v94 = vld [vmem:[%s1 + $0x18] sm:$0xff]
    %v95 = vld [vmem:[%s1 + $0x20] sm:$0xff]
    %v96 = vld [vmem:[%s1 + $0x28] sm:$0xff]
    %v97 = vld [vmem:[%s1 + $0x30] sm:$0xff]
    %v98 = vld [vmem:[%s1 + $0x38] sm:$0xff]
    %v99 = vld [vmem:[%s1 + $0x40] sm:$0xff]
    %v100 = vld [vmem:[%s1 + $0x48] sm:$0xff]
    %v101 = vld [vmem:[%s1 + $0x50] sm:$0xff]
    %v102 = vld [vmem:[%s1 + $0x58] sm:$0xff]
    %v103 = vld [vmem:[%s1 + $0x60] sm:$0xff]
    %v104 = vld [vmem:[%s1 + $0x68] sm:$0xff]
    %v105 = vld [vmem:[%s1 + $0x70] sm:$0xff]
    %v106 = vld [vmem:[%s1 + $0x78] sm:$0x33]
    %v107 = vld [vmem:[%s1 + $0x80] sm:$0x33]
    %v108 = vld [vmem:[%s1 + $0x88] sm:$0x33]
    %v109 = vld [vmem:[%s1 + $0x90] sm:$0x33]
    %v110 = vld [vmem:[%s1 + $0x98] sm:$0x33]
    %v131 = vunpack.c.l.b16 %v91
    %v132 = vunpack.c.h.b16 %v91
    %v133 = vunpack.c.l.b16 %v92
    %v134 = vunpack.c.h.b16 %v92
    %v135 = vunpack.c.l.b16 %v93
    %v136 = vunpack.c.h.b16 %v93
    %v137 = vunpack.c.l.b16 %v94
    %v138 = vunpack.c.h.b16 %v94
    %v139 = vunpack.c.l.b16 %v95
    %v140 = vunpack.c.h.b16 %v95
    %v141 = vunpack.c.l.b16 %v96
    %v142 = vunpack.c.h.b16 %v96
    %v143 = vunpack.c.l.b16 %v97
    %v144 = vunpack.c.h.b16 %v97
    %v145 = vunpack.c.l.b16 %v98
    %v146 = vunpack.c.h.b16 %v98
    %v147 = vunpack.c.l.b16 %v99
    %v148 = vunpack.c.h.b16 %v99
    %v149 = vunpack.c.l.b16 %v100
    %v150 = vunpack.c.h.b16 %v100
    %v151 = vunpack.c.l.b16 %v101
    %v152 = vunpack.c.h.b16 %v101
    %v153 = vunpack.c.l.b16 %v102
    %v154 = vunpack.c.h.b16 %v102
    %v155 = vunpack.c.l.b16 %v103
    %v156 = vunpack.c.h.b16 %v103
    %v157 = vunpack.c.l.b16 %v104
    %v158 = vunpack.c.h.b16 %v104
    %v159 = vunpack.c.l.b16 %v105
    %v160 = vunpack.c.h.b16 %v105
    %v161 = vunpack.c.l.b16 %v106
    %v162 = vunpack.c.h.b16 %v106
    %v163 = vunpack.c.l.b16 %v107
    %v164 = vunpack.c.h.b16 %v107
    %v165 = vunpack.c.l.b16 %v108
    %v166 = vunpack.c.h.b16 %v108
    %v167 = vunpack.c.l.b16 %v109
    %v168 = vunpack.c.h.b16 %v109
    %v169 = vunpack.c.l.b16 %v110
    %v170 = vunpack.c.h.b16 %v110
    %v171 = vpack.c.b16 %v141, %v131
    %v172 = vpack.c.b16 %v142, %v132
    %v173 = vpack.c.b16 %v143, %v133
    %v174 = vpack.c.b16 %v144, %v134
    %v175 = vpack.c.b16 %v145, %v135
    %v176 = vpack.c.b16 %v146, %v136
    %v177 = vpack.c.b16 %v147, %v137
    %v178 = vpack.c.b16 %v148, %v138
    %v179 = vpack.c.b16 %v149, %v139
    %v180 = vpack.c.b16 %v150, %v140
    %v181 = vpack.c.b16 %v161, %v151
    %v182 = vpack.c.b16 %v162, %v152
    %v183 = vpack.c.b16 %v163, %v153
    %v184 = vpack.c.b16 %v164, %v154
    %v185 = vpack.c.b16 %v165, %v155
    %v186 = vpack.c.b16 %v166, %v156
    %v187 = vpack.c.b16 %v167, %v157
    %v188 = vpack.c.b16 %v168, %v158
    %v189 = vpack.c.b16 %v169, %v159
    %v190 = vpack.c.b16 %v170, %v160
    %vm201 = vcmask 228352
    %v203 = vsel %vm201, %v83, 0
    %v206 = vsel %vm201, %v84, 0
    %v209 = vsel %vm201, %v85, 0
    %v212 = vsel %vm201, %v86, 0
    %v215 = vsel %vm201, %v87, 0
    %v218 = vsel %vm201, %v88, 0
    %v221 = vsel %vm201, %v89, 0
    %v224 = vsel %vm201, %v90, 0
    %vm226 = vcmask 1045504
    %v228 = vsel %vm226, %v181, 0
    %v231 = vsel %vm226, %v182, 0
    %v234 = vsel %vm226, %v183, 0
    %v237 = vsel %vm226, %v184, 0
    %v240 = vsel %vm226, %v185, 0
    %v243 = vsel %vm226, %v186, 0
    %v246 = vsel %vm226, %v187, 0
    %v249 = vsel %vm226, %v188, 0
    %v252 = vsel %vm226, %v189, 0
    %v255 = vsel %vm226, %v190, 0
    %257 = vmatprep.subr.bf16.mxu0 %v172
    %258 = vmatpush1.bf16.msra.mxu0 %v171
    %259 = vmatprep.subr.bf16.mxu0 %v231
    %260 = vmatpush1.bf16.msra.mxu0 %v228
    %261 = vmatprep.subr.bf16.mxu0 0
    %262 = vmatpush1.bf16.msra.mxu0 0
    %263 = vmatprep.subr.bf16.mxu0 0
    %264 = vmatpush1.bf16.msra.mxu0 0
    %265 = vmatprep.subr.bf16.mxu0 0
    %266 = vmatpush1.bf16.msra.mxu0 0
    %267 = vmatprep.subr.bf16.mxu0 0
    %268 = vmatpush1.bf16.msra.mxu0 0
    %269 = vmatprep.subr.bf16.mxu0 0
    %270 = vmatpush1.bf16.msra.mxu0 0
    %271 = vmatprep.subr.bf16.mxu0 0
    %272 = vmatpush1.bf16.msra.mxu0 0
    %273 = vmatprep.subr.bf16.mxu0 0
    %274 = vmatpush1.bf16.msra.mxu0 0
    %275 = vmatprep.subr.bf16.mxu0 0
    %276 = vmatpush1.bf16.msra.mxu0 0
    %277 = vmatprep.subr.bf16.mxu0 0
    %278 = vmatpush1.bf16.msra.mxu0 0
    %279 = vmatprep.subr.bf16.mxu0 0
    %280 = vmatpush1.bf16.msra.mxu0 0
    %281 = vmatprep.subr.bf16.mxu0 0
    %282 = vmatpush1.bf16.msra.mxu0 0
    %283 = vmatprep.subr.bf16.mxu0 0
    %284 = vmatpush1.bf16.msra.mxu0 0
    %285 = vmatprep.subr.bf16.mxu0 0
    %286 = vmatpush1.bf16.msra.mxu0 0
    %287 = vmatprep.subr.bf16.mxu0 0
    %288 = vmatpush1.bf16.msra.mxu0 0
    %289 = vmatprep.mubr.bf16.mxu0 0
    %290 = vmatmul.mubr.bf16.gmra.mrb[0].mxu0 %v203
    %v291 = vpop.f32.mrb[0].mxu0
    %v292 = vadd.f32 0.0, %v291
    %v293 = vpop.f32.mrb[0].mxu0
    %v294 = vadd.f32 0.0, %v293
    %v295 = vpop.f32.mrb[0].mxu0
    %v296 = vadd.f32 0.0, %v295
    %v297 = vpop.f32.mrb[0].mxu0
    %v298 = vadd.f32 0.0, %v297
    %299 = vmatprep.mubr.bf16.mxu0 0
    %300 = vmatmul.mubr.bf16.gmra.mrb[0].mxu0 %v206
    %v301 = vpop.f32.mrb[0].mxu0
    %v302 = vadd.f32 0.0, %v301
    %v303 = vpop.f32.mrb[0].mxu0
    %v304 = vadd.f32 0.0, %v303
    %v305 = vpop.f32.mrb[0].mxu0
    %v306 = vadd.f32 0.0, %v305
    %v307 = vpop.f32.mrb[0].mxu0
    %v308 = vadd.f32 0.0, %v307
    %309 = vmatprep.mubr.bf16.mxu0 0
    %310 = vmatmul.mubr.bf16.gmra.mrb[0].mxu0 %v209
    %v311 = vpop.f32.mrb[0].mxu0
    %v312 = vadd.f32 0.0, %v311
    %v313 = vpop.f32.mrb[0].mxu0
    %v314 = vadd.f32 0.0, %v313
    %v315 = vpop.f32.mrb[0].mxu0
    %v316 = vadd.f32 0.0, %v315
    %v317 = vpop.f32.mrb[0].mxu0
    %v318 = vadd.f32 0.0, %v317
    %319 = vmatprep.mubr.bf16.mxu0 0
    %320 = vmatmul.mubr.bf16.gmra.mrb[0].mxu0 %v212
    %v321 = vpop.f32.mrb[0].mxu0
    %v322 = vadd.f32 0.0, %v321
    %v323 = vpop.f32.mrb[0].mxu0
    %v324 = vadd.f32 0.0, %v323
    %v325 = vpop.f32.mrb[0].mxu0
    %v326 = vadd.f32 0.0, %v325
    %v327 = vpop.f32.mrb[0].mxu0
    %v328 = vadd.f32 0.0, %v327
    %329 = vmatprep.mubr.bf16.mxu0 0
    %330 = vmatmul.mubr.bf16.gmra.mrb[0].mxu0 %v215
    %v331 = vpop.f32.mrb[0].mxu0
    %v332 = vadd.f32 0.0, %v331
    %v333 = vpop.f32.mrb[0].mxu0
    %v334 = vadd.f32 0.0, %v333
    %v335 = vpop.f32.mrb[0].mxu0
    %v336 = vadd.f32 0.0, %v335
    %v337 = vpop.f32.mrb[0].mxu0
    %v338 = vadd.f32 0.0, %v337
    %339 = vmatprep.mubr.bf16.mxu0 0
    %340 = vmatmul.mubr.bf16.gmra.mrb[0].mxu0 %v218
    %v341 = vpop.f32.mrb[0].mxu0
    %v342 = vadd.f32 0.0, %v341
    %v343 = vpop.f32.mrb[0].mxu0
    %v344 = vadd.f32 0.0, %v343
    %v345 = vpop.f32.mrb[0].mxu0
    %v346 = vadd.f32 0.0, %v345
    %v347 = vpop.f32.mrb[0].mxu0
    %v348 = vadd.f32 0.0, %v347
    %349 = vmatprep.mubr.bf16.mxu0 0
    %350 = vmatmul.mubr.bf16.gmra.mrb[0].mxu0 %v221
    %v351 = vpop.f32.mrb[0].mxu0
    %v352 = vadd.f32 0.0, %v351
    %v353 = vpop.f32.mrb[0].mxu0
    %v354 = vadd.f32 0.0, %v353
    %v355 = vpop.f32.mrb[0].mxu0
    %v356 = vadd.f32 0.0, %v355
    %v357 = vpop.f32.mrb[0].mxu0
    %v358 = vadd.f32 0.0, %v357
    %359 = vmatprep.mubr.bf16.mxu0 0
    %360 = vmatmul.mubr.bf16.gmra.mrb[0].mxu0 %v224
    %v361 = vpop.f32.mrb[0].mxu0
    %v362 = vadd.f32 0.0, %v361
    %v363 = vpop.f32.mrb[0].mxu0
    %v364 = vadd.f32 0.0, %v363
    %v365 = vpop.f32.mrb[0].mxu0
    %v366 = vadd.f32 0.0, %v365
    %v367 = vpop.f32.mrb[0].mxu0
    %v368 = vadd.f32 0.0, %v367
    %369 = vdwg.mxu0
    %370 = vmatprep.subr.bf16.mxu0 %v174
    %371 = vmatpush1.bf16.msra.mxu0 %v173
    %372 = vmatprep.subr.bf16.mxu0 %v237
    %373 = vmatpush1.bf16.msra.mxu0 %v234
    %374 = vmatprep.subr.bf16.mxu0 0
    %375 = vmatpush1.bf16.msra.mxu0 0
    %376 = vmatprep.subr.bf16.mxu0 0
    %377 = vmatpush1.bf16.msra.mxu0 0
    %378 = vmatprep.subr.bf16.mxu0 0
    %379 = vmatpush1.bf16.msra.mxu0 0
    %380 = vmatprep.subr.bf16.mxu0 0
    %381 = vmatpush1.bf16.msra.mxu0 0
    %382 = vmatprep.subr.bf16.mxu0 0
    %383 = vmatpush1.bf16.msra.mxu0 0
    %384 = vmatprep.subr.bf16.mxu0 0
    %385 = vmatpush1.bf16.msra.mxu0 0
    %386 = vmatprep.subr.bf16.mxu0 0
    %387 = vmatpush1.bf16.msra.mxu0 0
    %388 = vmatprep.subr.bf16.mxu0 0
    %389 = vmatpush1.bf16.msra.mxu0 0
    %390 = vmatprep.subr.bf16.mxu0 0
    %391 = vmatpush1.bf16.msra.mxu0 0
    %392 = vmatprep.subr.bf16.mxu0 0
    %393 = vmatpush1.bf16.msra.mxu0 0
    %394 = vmatprep.subr.bf16.mxu0 0
    %395 = vmatpush1.bf16.msra.mxu0 0
    %396 = vmatprep.subr.bf16.mxu0 0
    %397 = vmatpush1.bf16.msra.mxu0 0
    %398 = vmatprep.subr.bf16.mxu0 0
    %399 = vmatpush1.bf16.msra.mxu0 0
    %400 = vmatprep.subr.bf16.mxu0 0
    %401 = vmatpush1.bf16.msra.mxu0 0
    %402 = vmatprep.mubr.bf16.mxu0 0
    %403 = vmatmul.mubr.bf16.gmra.mrb[0].mxu0 %v203
    %v404 = vpop.f32.mrb[0].mxu0
    %v405 = vadd.f32 0.0, %v404
    %v406 = vpop.f32.mrb[0].mxu0
    %v407 = vadd.f32 0.0, %v406
    %v408 = vpop.f32.mrb[0].mxu0
    %v409 = vadd.f32 0.0, %v408
    %v410 = vpop.f32.mrb[0].mxu0
    %v411 = vadd.f32 0.0, %v410
    %412 = vmatprep.mubr.bf16.mxu0 0
    %413 = vmatmul.mubr.bf16.gmra.mrb[0].mxu0 %v206
    %v414 = vpop.f32.mrb[0].mxu0
    %v415 = vadd.f32 0.0, %v414
    %v416 = vpop.f32.mrb[0].mxu0
    %v417 = vadd.f32 0.0, %v416
    %v418 = vpop.f32.mrb[0].mxu0
    %v419 = vadd.f32 0.0, %v418
    %v420 = vpop.f32.mrb[0].mxu0
    %v421 = vadd.f32 0.0, %v420
    %422 = vmatprep.mubr.bf16.mxu0 0
    %423 = vmatmul.mubr.bf16.gmra.mrb[0].mxu0 %v209
    %v424 = vpop.f32.mrb[0].mxu0
    %v425 = vadd.f32 0.0, %v424
    %v426 = vpop.f32.mrb[0].mxu0
    %v427 = vadd.f32 0.0, %v426
    %v428 = vpop.f32.mrb[0].mxu0
    %v429 = vadd.f32 0.0, %v428
    %v430 = vpop.f32.mrb[0].mxu0
    %v431 = vadd.f32 0.0, %v430
    %432 = vmatprep.mubr.bf16.mxu0 0
    %433 = vmatmul.mubr.bf16.gmra.mrb[0].mxu0 %v212
    %v434 = vpop.f32.mrb[0].mxu0
    %v435 = vadd.f32 0.0, %v434
    %v436 = vpop.f32.mrb[0].mxu0
    %v437 = vadd.f32 0.0, %v436
    %v438 = vpop.f32.mrb[0].mxu0
    %v439 = vadd.f32 0.0, %v438
    %v440 = vpop.f32.mrb[0].mxu0
    %v441 = vadd.f32 0.0, %v440
    %442 = vmatprep.mubr.bf16.mxu0 0
    %443 = vmatmul.mubr.bf16.gmra.mrb[0].mxu0 %v215
    %v444 = vpop.f32.mrb[0].mxu0
    %v445 = vadd.f32 0.0, %v444
    %v446 = vpop.f32.mrb[0].mxu0
    %v447 = vadd.f32 0.0, %v446
    %v448 = vpop.f32.mrb[0].mxu0
    %v449 = vadd.f32 0.0, %v448
    %v450 = vpop.f32.mrb[0].mxu0
    %v451 = vadd.f32 0.0, %v450
    %452 = vmatprep.mubr.bf16.mxu0 0
    %453 = vmatmul.mubr.bf16.gmra.mrb[0].mxu0 %v218
    %v454 = vpop.f32.mrb[0].mxu0
    %v455 = vadd.f32 0.0, %v454
    %v456 = vpop.f32.mrb[0].mxu0
    %v457 = vadd.f32 0.0, %v456
    %v458 = vpop.f32.mrb[0].mxu0
    %v459 = vadd.f32 0.0, %v458
    %v460 = vpop.f32.mrb[0].mxu0
    %v461 = vadd.f32 0.0, %v460
    %462 = vmatprep.mubr.bf16.mxu0 0
    %463 = vmatmul.mubr.bf16.gmra.mrb[0].mxu0 %v221
    %v464 = vpop.f32.mrb[0].mxu0
    %v465 = vadd.f32 0.0, %v464
    %v466 = vpop.f32.mrb[0].mxu0
    %v467 = vadd.f32 0.0, %v466
    %v468 = vpop.f32.mrb[0].mxu0
    %v469 = vadd.f32 0.0, %v468
    %v470 = vpop.f32.mrb[0].mxu0
    %v471 = vadd.f32 0.0, %v470
    %472 = vmatprep.mubr.bf16.mxu0 0
    %473 = vmatmul.mubr.bf16.gmra.mrb[0].mxu0 %v224
    %v474 = vpop.f32.mrb[0].mxu0
    %v475 = vadd.f32 0.0, %v474
    %v476 = vpop.f32.mrb[0].mxu0
    %v477 = vadd.f32 0.0, %v476
    %v478 = vpop.f32.mrb[0].mxu0
    %v479 = vadd.f32 0.0, %v478
    %v480 = vpop.f32.mrb[0].mxu0
    %v481 = vadd.f32 0.0, %v480
    %482 = vdwg.mxu0
    %483 = vmatprep.subr.bf16.mxu0 %v176
    %484 = vmatpush1.bf16.msra.mxu0 %v175
    %485 = vmatprep.subr.bf16.mxu0 %v243
    %486 = vmatpush1.bf16.msra.mxu0 %v240
    %487 = vmatprep.subr.bf16.mxu0 0
    %488 = vmatpush1.bf16.msra.mxu0 0
    %489 = vmatprep.subr.bf16.mxu0 0
    %490 = vmatpush1.bf16.msra.mxu0 0
    %491 = vmatprep.subr.bf16.mxu0 0
    %492 = vmatpush1.bf16.msra.mxu0 0
    %493 = vmatprep.subr.bf16.mxu0 0
    %494 = vmatpush1.bf16.msra.mxu0 0
    %495 = vmatprep.subr.bf16.mxu0 0
    %496 = vmatpush1.bf16.msra.mxu0 0
    %497 = vmatprep.subr.bf16.mxu0 0
    %498 = vmatpush1.bf16.msra.mxu0 0
    %499 = vmatprep.subr.bf16.mxu0 0
    %500 = vmatpush1.bf16.msra.mxu0 0
    %501 = vmatprep.subr.bf16.mxu0 0
    %502 = vmatpush1.bf16.msra.mxu0 0
    %503 = vmatprep.subr.bf16.mxu0 0
    %504 = vmatpush1.bf16.msra.mxu0 0
    %505 = vmatprep.subr.bf16.mxu0 0
    %506 = vmatpush1.bf16.msra.mxu0 0
    %507 = vmatprep.subr.bf16.mxu0 0
    %508 = vmatpush1.bf16.msra.mxu0 0
    %509 = vmatprep.subr.bf16.mxu0 0
    %510 = vmatpush1.bf16.msra.mxu0 0
    %511 = vmatprep.subr.bf16.mxu0 0
    %512 = vmatpush1.bf16.msra.mxu0 0
    %513 = vmatprep.subr.bf16.mxu0 0
    %514 = vmatpush1.bf16.msra.mxu0 0
    %515 = vmatprep.mubr.bf16.mxu0 0
    %516 = vmatmul.mubr.bf16.gmra.mrb[0].mxu0 %v203
    %v517 = vpop.f32.mrb[0].mxu0
    %v518 = vadd.f32 0.0, %v517
    %v519 = vpop.f32.mrb[0].mxu0
    %v520 = vadd.f32 0.0, %v519
    %v521 = vpop.f32.mrb[0].mxu0
    %v522 = vadd.f32 0.0, %v521
    %v523 = vpop.f32.mrb[0].mxu0
    %v524 = vadd.f32 0.0, %v523
    %525 = vmatprep.mubr.bf16.mxu0 0
    %526 = vmatmul.mubr.bf16.gmra.mrb[0].mxu0 %v206
    %v527 = vpop.f32.mrb[0].mxu0
    %v528 = vadd.f32 0.0, %v527
    %v529 = vpop.f32.mrb[0].mxu0
    %v530 = vadd.f32 0.0, %v529
    %v531 = vpop.f32.mrb[0].mxu0
    %v532 = vadd.f32 0.0, %v531
    %v533 = vpop.f32.mrb[0].mxu0
    %v534 = vadd.f32 0.0, %v533
    %535 = vmatprep.mubr.bf16.mxu0 0
    %536 = vmatmul.mubr.bf16.gmra.mrb[0].mxu0 %v209
    %v537 = vpop.f32.mrb[0].mxu0
    %v538 = vadd.f32 0.0, %v537
    %v539 = vpop.f32.mrb[0].mxu0
    %v540 = vadd.f32 0.0, %v539
    %v541 = vpop.f32.mrb[0].mxu0
    %v542 = vadd.f32 0.0, %v541
    %v543 = vpop.f32.mrb[0].mxu0
    %v544 = vadd.f32 0.0, %v543
    %545 = vmatprep.mubr.bf16.mxu0 0
    %546 = vmatmul.mubr.bf16.gmra.mrb[0].mxu0 %v212
    %v547 = vpop.f32.mrb[0].mxu0
    %v548 = vadd.f32 0.0, %v547
    %v549 = vpop.f32.mrb[0].mxu0
    %v550 = vadd.f32 0.0, %v549
    %v551 = vpop.f32.mrb[0].mxu0
    %v552 = vadd.f32 0.0, %v551
    %v553 = vpop.f32.mrb[0].mxu0
    %v554 = vadd.f32 0.0, %v553
    %555 = vmatprep.mubr.bf16.mxu0 0
    %556 = vmatmul.mubr.bf16.gmra.mrb[0].mxu0 %v215
    %v557 = vpop.f32.mrb[0].mxu0
    %v558 = vadd.f32 0.0, %v557
    %v559 = vpop.f32.mrb[0].mxu0
    %v560 = vadd.f32 0.0, %v559
    %v561 = vpop.f32.mrb[0].mxu0
    %v562 = vadd.f32 0.0, %v561
    %v563 = vpop.f32.mrb[0].mxu0
    %v564 = vadd.f32 0.0, %v563
    %565 = vmatprep.mubr.bf16.mxu0 0
    %566 = vmatmul.mubr.bf16.gmra.mrb[0].mxu0 %v218
    %v567 = vpop.f32.mrb[0].mxu0
    %v568 = vadd.f32 0.0, %v567
    %v569 = vpop.f32.mrb[0].mxu0
    %v570 = vadd.f32 0.0, %v569
    %v571 = vpop.f32.mrb[0].mxu0
    %v572 = vadd.f32 0.0, %v571
    %v573 = vpop.f32.mrb[0].mxu0
    %v574 = vadd.f32 0.0, %v573
    %575 = vmatprep.mubr.bf16.mxu0 0
    %576 = vmatmul.mubr.bf16.gmra.mrb[0].mxu0 %v221
    %v577 = vpop.f32.mrb[0].mxu0
    %v578 = vadd.f32 0.0, %v577
    %v579 = vpop.f32.mrb[0].mxu0
    %v580 = vadd.f32 0.0, %v579
    %v581 = vpop.f32.mrb[0].mxu0
    %v582 = vadd.f32 0.0, %v581
    %v583 = vpop.f32.mrb[0].mxu0
    %v584 = vadd.f32 0.0, %v583
    %585 = vmatprep.mubr.bf16.mxu0 0
    %586 = vmatmul.mubr.bf16.gmra.mrb[0].mxu0 %v224
    %v587 = vpop.f32.mrb[0].mxu0
    %v588 = vadd.f32 0.0, %v587
    %v589 = vpop.f32.mrb[0].mxu0
    %v590 = vadd.f32 0.0, %v589
    %v591 = vpop.f32.mrb[0].mxu0
    %v592 = vadd.f32 0.0, %v591
    %v593 = vpop.f32.mrb[0].mxu0
    %v594 = vadd.f32 0.0, %v593
    %595 = vdwg.mxu0
    %596 = vmatprep.subr.bf16.mxu0 %v178
    %597 = vmatpush1.bf16.msra.mxu0 %v177
    %598 = vmatprep.subr.bf16.mxu0 %v249
    %599 = vmatpush1.bf16.msra.mxu0 %v246
    %600 = vmatprep.subr.bf16.mxu0 0
    %601 = vmatpush1.bf16.msra.mxu0 0
    %602 = vmatprep.subr.bf16.mxu0 0
    %603 = vmatpush1.bf16.msra.mxu0 0
    %604 = vmatprep.subr.bf16.mxu0 0
    %605 = vmatpush1.bf16.msra.mxu0 0
    %606 = vmatprep.subr.bf16.mxu0 0
    %607 = vmatpush1.bf16.msra.mxu0 0
    %608 = vmatprep.subr.bf16.mxu0 0
    %609 = vmatpush1.bf16.msra.mxu0 0
    %610 = vmatprep.subr.bf16.mxu0 0
    %611 = vmatpush1.bf16.msra.mxu0 0
    %612 = vmatprep.subr.bf16.mxu0 0
    %613 = vmatpush1.bf16.msra.mxu0 0
    %614 = vmatprep.subr.bf16.mxu0 0
    %615 = vmatpush1.bf16.msra.mxu0 0
    %616 = vmatprep.subr.bf16.mxu0 0
    %617 = vmatpush1.bf16.msra.mxu0 0
    %618 = vmatprep.subr.bf16.mxu0 0
    %619 = vmatpush1.bf16.msra.mxu0 0
    %620 = vmatprep.subr.bf16.mxu0 0
    %621 = vmatpush1.bf16.msra.mxu0 0
    %622 = vmatprep.subr.bf16.mxu0 0
    %623 = vmatpush1.bf16.msra.mxu0 0
    %624 = vmatprep.subr.bf16.mxu0 0
    %625 = vmatpush1.bf16.msra.mxu0 0
    %626 = vmatprep.subr.bf16.mxu0 0
    %627 = vmatpush1.bf16.msra.mxu0 0
    %628 = vmatprep.mubr.bf16.mxu0 0
    %629 = vmatmul.mubr.bf16.gmra.mrb[0].mxu0 %v203
    %v630 = vpop.f32.mrb[0].mxu0
    %v631 = vadd.f32 0.0, %v630
    %v632 = vpop.f32.mrb[0].mxu0
    %v633 = vadd.f32 0.0, %v632
    %v634 = vpop.f32.mrb[0].mxu0
    %v635 = vadd.f32 0.0, %v634
    %v636 = vpop.f32.mrb[0].mxu0
    %v637 = vadd.f32 0.0, %v636
    %638 = vmatprep.mubr.bf16.mxu0 0
    %639 = vmatmul.mubr.bf16.gmra.mrb[0].mxu0 %v206
    %v640 = vpop.f32.mrb[0].mxu0
    %v641 = vadd.f32 0.0, %v640
    %v642 = vpop.f32.mrb[0].mxu0
    %v643 = vadd.f32 0.0, %v642
    %v644 = vpop.f32.mrb[0].mxu0
    %v645 = vadd.f32 0.0, %v644
    %v646 = vpop.f32.mrb[0].mxu0
    %v647 = vadd.f32 0.0, %v646
    %648 = vmatprep.mubr.bf16.mxu0 0
    %649 = vmatmul.mubr.bf16.gmra.mrb[0].mxu0 %v209
    %v650 = vpop.f32.mrb[0].mxu0
    %v651 = vadd.f32 0.0, %v650
    %v652 = vpop.f32.mrb[0].mxu0
    %v653 = vadd.f32 0.0, %v652
    %v654 = vpop.f32.mrb[0].mxu0
    %v655 = vadd.f32 0.0, %v654
    %v656 = vpop.f32.mrb[0].mxu0
    %v657 = vadd.f32 0.0, %v656
    %658 = vmatprep.mubr.bf16.mxu0 0
    %659 = vmatmul.mubr.bf16.gmra.mrb[0].mxu0 %v212
    %v660 = vpop.f32.mrb[0].mxu0
    %v661 = vadd.f32 0.0, %v660
    %v662 = vpop.f32.mrb[0].mxu0
    %v663 = vadd.f32 0.0, %v662
    %v664 = vpop.f32.mrb[0].mxu0
    %v665 = vadd.f32 0.0, %v664
    %v666 = vpop.f32.mrb[0].mxu0
    %v667 = vadd.f32 0.0, %v666
    %668 = vmatprep.mubr.bf16.mxu0 0
    %669 = vmatmul.mubr.bf16.gmra.mrb[0].mxu0 %v215
    %v670 = vpop.f32.mrb[0].mxu0
    %v671 = vadd.f32 0.0, %v670
    %v672 = vpop.f32.mrb[0].mxu0
    %v673 = vadd.f32 0.0, %v672
    %v674 = vpop.f32.mrb[0].mxu0
    %v675 = vadd.f32 0.0, %v674
    %v676 = vpop.f32.mrb[0].mxu0
    %v677 = vadd.f32 0.0, %v676
    %678 = vmatprep.mubr.bf16.mxu0 0
    %679 = vmatmul.mubr.bf16.gmra.mrb[0].mxu0 %v218
    %v680 = vpop.f32.mrb[0].mxu0
    %v681 = vadd.f32 0.0, %v680
    %v682 = vpop.f32.mrb[0].mxu0
    %v683 = vadd.f32 0.0, %v682
    %v684 = vpop.f32.mrb[0].mxu0
    %v685 = vadd.f32 0.0, %v684
    %v686 = vpop.f32.mrb[0].mxu0
    %v687 = vadd.f32 0.0, %v686
    %688 = vmatprep.mubr.bf16.mxu0 0
    %689 = vmatmul.mubr.bf16.gmra.mrb[0].mxu0 %v221
    %v690 = vpop.f32.mrb[0].mxu0
    %v691 = vadd.f32 0.0, %v690
    %v692 = vpop.f32.mrb[0].mxu0
    %v693 = vadd.f32 0.0, %v692
    %v694 = vpop.f32.mrb[0].mxu0
    %v695 = vadd.f32 0.0, %v694
    %v696 = vpop.f32.mrb[0].mxu0
    %v697 = vadd.f32 0.0, %v696
    %698 = vmatprep.mubr.bf16.mxu0 0
    %699 = vmatmul.mubr.bf16.gmra.mrb[0].mxu0 %v224
    %v700 = vpop.f32.mrb[0].mxu0
    %v701 = vadd.f32 0.0, %v700
    %v702 = vpop.f32.mrb[0].mxu0
    %v703 = vadd.f32 0.0, %v702
    %v704 = vpop.f32.mrb[0].mxu0
    %v705 = vadd.f32 0.0, %v704
    %v706 = vpop.f32.mrb[0].mxu0
    %v707 = vadd.f32 0.0, %v706
    %708 = vdwg.mxu0
    %709 = vmatprep.subr.bf16.mxu0 %v180
    %710 = vmatpush1.bf16.msra.mxu0 %v179
    %711 = vmatprep.subr.bf16.mxu0 %v255
    %712 = vmatpush1.bf16.msra.mxu0 %v252
    %713 = vmatprep.subr.bf16.mxu0 0
    %714 = vmatpush1.bf16.msra.mxu0 0
    %715 = vmatprep.subr.bf16.mxu0 0
    %716 = vmatpush1.bf16.msra.mxu0 0
    %717 = vmatprep.subr.bf16.mxu0 0
    %718 = vmatpush1.bf16.msra.mxu0 0
    %719 = vmatprep.subr.bf16.mxu0 0
    %720 = vmatpush1.bf16.msra.mxu0 0
    %721 = vmatprep.subr.bf16.mxu0 0
    %722 = vmatpush1.bf16.msra.mxu0 0
    %723 = vmatprep.subr.bf16.mxu0 0
    %724 = vmatpush1.bf16.msra.mxu0 0
    %725 = vmatprep.subr.bf16.mxu0 0
    %726 = vmatpush1.bf16.msra.mxu0 0
    %727 = vmatprep.subr.bf16.mxu0 0
    %728 = vmatpush1.bf16.msra.mxu0 0
    %729 = vmatprep.subr.bf16.mxu0 0
    %730 = vmatpush1.bf16.msra.mxu0 0
    %731 = vmatprep.subr.bf16.mxu0 0
    %732 = vmatpush1.bf16.msra.mxu0 0
    %733 = vmatprep.subr.bf16.mxu0 0
    %734 = vmatpush1.bf16.msra.mxu0 0
    %735 = vmatprep.subr.bf16.mxu0 0
    %736 = vmatpush1.bf16.msra.mxu0 0
    %737 = vmatprep.subr.bf16.mxu0 0
    %738 = vmatpush1.bf16.msra.mxu0 0
    %739 = vmatprep.subr.bf16.mxu0 0
    %740 = vmatpush1.bf16.msra.mxu0 0
    %741 = vmatprep.mubr.bf16.mxu0 0
    %742 = vmatmul.mubr.bf16.gmra.mrb[0].mxu0 %v203
    %v743 = vpop.f32.mrb[0].mxu0
    %v744 = vadd.f32 0.0, %v743
    %v745 = vpop.f32.mrb[0].mxu0
    %v746 = vadd.f32 0.0, %v745
    %v747 = vpop.f32.mrb[0].mxu0
    %v748 = vadd.f32 0.0, %v747
    %v749 = vpop.f32.mrb[0].mxu0
    %v750 = vadd.f32 0.0, %v749
    %751 = vmatprep.mubr.bf16.mxu0 0
    %752 = vmatmul.mubr.bf16.gmra.mrb[0].mxu0 %v206
    %v753 = vpop.f32.mrb[0].mxu0
    %v754 = vadd.f32 0.0, %v753
    %v755 = vpop.f32.mrb[0].mxu0
    %v756 = vadd.f32 0.0, %v755
    %v757 = vpop.f32.mrb[0].mxu0
    %v758 = vadd.f32 0.0, %v757
    %v759 = vpop.f32.mrb[0].mxu0
    %v760 = vadd.f32 0.0, %v759
    %761 = vmatprep.mubr.bf16.mxu0 0
    %762 = vmatmul.mubr.bf16.gmra.mrb[0].mxu0 %v209
    %v763 = vpop.f32.mrb[0].mxu0
    %v764 = vadd.f32 0.0, %v763
    %v765 = vpop.f32.mrb[0].mxu0
    %v766 = vadd.f32 0.0, %v765
    %v767 = vpop.f32.mrb[0].mxu0
    %v768 = vadd.f32 0.0, %v767
    %v769 = vpop.f32.mrb[0].mxu0
    %v770 = vadd.f32 0.0, %v769
    %771 = vmatprep.mubr.bf16.mxu0 0
    %772 = vmatmul.mubr.bf16.gmra.mrb[0].mxu0 %v212
    %v773 = vpop.f32.mrb[0].mxu0
    %v774 = vadd.f32 0.0, %v773
    %v775 = vpop.f32.mrb[0].mxu0
    %v776 = vadd.f32 0.0, %v775
    %v777 = vpop.f32.mrb[0].mxu0
    %v778 = vadd.f32 0.0, %v777
    %v779 = vpop.f32.mrb[0].mxu0
    %v780 = vadd.f32 0.0, %v779
    %781 = vmatprep.mubr.bf16.mxu0 0
    %782 = vmatmul.mubr.bf16.gmra.mrb[0].mxu0 %v215
    %v783 = vpop.f32.mrb[0].mxu0
    %v784 = vadd.f32 0.0, %v783
    %v785 = vpop.f32.mrb[0].mxu0
    %v786 = vadd.f32 0.0, %v785
    %v787 = vpop.f32.mrb[0].mxu0
    %v788 = vadd.f32 0.0, %v787
    %v789 = vpop.f32.mrb[0].mxu0
    %v790 = vadd.f32 0.0, %v789
    %791 = vmatprep.mubr.bf16.mxu0 0
    %792 = vmatmul.mubr.bf16.gmra.mrb[0].mxu0 %v218
    %v793 = vpop.f32.mrb[0].mxu0
    %v794 = vadd.f32 0.0, %v793
    %v795 = vpop.f32.mrb[0].mxu0
    %v796 = vadd.f32 0.0, %v795
    %v797 = vpop.f32.mrb[0].mxu0
    %v798 = vadd.f32 0.0, %v797
    %v799 = vpop.f32.mrb[0].mxu0
    %v800 = vadd.f32 0.0, %v799
    %801 = vmatprep.mubr.bf16.mxu0 0
    %802 = vmatmul.mubr.bf16.gmra.mrb[0].mxu0 %v221
    %v803 = vpop.f32.mrb[0].mxu0
    %v804 = vadd.f32 0.0, %v803
    %v805 = vpop.f32.mrb[0].mxu0
    %v806 = vadd.f32 0.0, %v805
    %v807 = vpop.f32.mrb[0].mxu0
    %v808 = vadd.f32 0.0, %v807
    %v809 = vpop.f32.mrb[0].mxu0
    %v810 = vadd.f32 0.0, %v809
    %811 = vmatprep.mubr.bf16.mxu0 0
    %812 = vmatmul.mubr.bf16.gmra.mrb[0].mxu0 %v224
    %v813 = vpop.f32.mrb[0].mxu0
    %v814 = vadd.f32 0.0, %v813
    %v815 = vpop.f32.mrb[0].mxu0
    %v816 = vadd.f32 0.0, %v815
    %v817 = vpop.f32.mrb[0].mxu0
    %v818 = vadd.f32 0.0, %v817
    %v819 = vpop.f32.mrb[0].mxu0
    %v820 = vadd.f32 0.0, %v819
    %821 = vdwg.mxu0
    %v822 = vpack.c.bf16 %v296, %v292
    %v823 = vpack.c.bf16 %v298, %v294
    %v824 = vpack.c.bf16 %v409, %v405
    %v825 = vpack.c.bf16 %v411, %v407
    %v826 = vpack.c.bf16 %v522, %v518
    %v827 = vpack.c.bf16 %v524, %v520
    %v828 = vpack.c.bf16 %v635, %v631
    %v829 = vpack.c.bf16 %v637, %v633
    %v830 = vpack.c.bf16 %v748, %v744
    %v831 = vpack.c.bf16 %v750, %v746
    %v832 = vpack.c.bf16 %v306, %v302
    %v833 = vpack.c.bf16 %v308, %v304
    %v834 = vpack.c.bf16 %v419, %v415
    %v835 = vpack.c.bf16 %v421, %v417
    %v836 = vpack.c.bf16 %v532, %v528
    %v837 = vpack.c.bf16 %v534, %v530
    %v838 = vpack.c.bf16 %v645, %v641
    %v839 = vpack.c.bf16 %v647, %v643
    %v840 = vpack.c.bf16 %v758, %v754
    %v841 = vpack.c.bf16 %v760, %v756
    %v842 = vpack.c.bf16 %v316, %v312
    %v843 = vpack.c.bf16 %v318, %v314
    %v844 = vpack.c.bf16 %v429, %v425
    %v845 = vpack.c.bf16 %v431, %v427
    %v846 = vpack.c.bf16 %v542, %v538
    %v847 = vpack.c.bf16 %v544, %v540
    %v848 = vpack.c.bf16 %v655, %v651
    %v849 = vpack.c.bf16 %v657, %v653
    %v850 = vpack.c.bf16 %v768, %v764
    %v851 = vpack.c.bf16 %v770, %v766
    %v852 = vpack.c.bf16 %v326, %v322
    %v853 = vpack.c.bf16 %v328, %v324
    %v854 = vpack.c.bf16 %v439, %v435
    %v855 = vpack.c.bf16 %v441, %v437
    %v856 = vpack.c.bf16 %v552, %v548
    %v857 = vpack.c.bf16 %v554, %v550
    %v858 = vpack.c.bf16 %v665, %v661
    %v859 = vpack.c.bf16 %v667, %v663
    %v860 = vpack.c.bf16 %v778, %v774
    %v861 = vpack.c.bf16 %v780, %v776
    %v862 = vpack.c.bf16 %v336, %v332
    %v863 = vpack.c.bf16 %v338, %v334
    %v864 = vpack.c.bf16 %v449, %v445
    %v865 = vpack.c.bf16 %v451, %v447
    %v866 = vpack.c.bf16 %v562, %v558
    %v867 = vpack.c.bf16 %v564, %v560
    %v868 = vpack.c.bf16 %v675, %v671
    %v869 = vpack.c.bf16 %v677, %v673
    %v870 = vpack.c.bf16 %v788, %v784
    %v871 = vpack.c.bf16 %v790, %v786
    %v872 = vpack.c.bf16 %v346, %v342
    %v873 = vpack.c.bf16 %v348, %v344
    %v874 = vpack.c.bf16 %v459, %v455
    %v875 = vpack.c.bf16 %v461, %v457
    %v876 = vpack.c.bf16 %v572, %v568
    %v877 = vpack.c.bf16 %v574, %v570
    %v878 = vpack.c.bf16 %v685, %v681
    %v879 = vpack.c.bf16 %v687, %v683
    %v880 = vpack.c.bf16 %v798, %v794
    %v881 = vpack.c.bf16 %v800, %v796
    %v882 = vpack.c.bf16 %v356, %v352
    %v883 = vpack.c.bf16 %v358, %v354
    %v884 = vpack.c.bf16 %v469, %v465
    %v885 = vpack.c.bf16 %v471, %v467
    %v886 = vpack.c.bf16 %v582, %v578
    %v887 = vpack.c.bf16 %v584, %v580
    %v888 = vpack.c.bf16 %v695, %v691
    %v889 = vpack.c.bf16 %v697, %v693
    %v890 = vpack.c.bf16 %v808, %v804
    %v891 = vpack.c.bf16 %v810, %v806
    %v892 = vpack.c.bf16 %v366, %v362
    %v893 = vpack.c.bf16 %v368, %v364
    %v894 = vpack.c.bf16 %v479, %v475
    %v895 = vpack.c.bf16 %v481, %v477
    %v896 = vpack.c.bf16 %v592, %v588
    %v897 = vpack.c.bf16 %v594, %v590
    %v898 = vpack.c.bf16 %v705, %v701
    %v899 = vpack.c.bf16 %v707, %v703
    %v900 = vpack.c.bf16 %v818, %v814
    %v901 = vpack.c.bf16 %v820, %v816
    %v902 = vld [vmem:[#allocation2] sm:$0xff]
    %v903 = vld [vmem:[#allocation2 + $0x8] sm:$0xff]
    %v904 = vld [vmem:[#allocation2 + $0x10] sm:$0xff]
    %v905 = vld [vmem:[#allocation2 + $0x18] sm:$0xff]
    %v906 = vld [vmem:[#allocation2 + $0x20] sm:$0xff]
    %v907 = vld [vmem:[#allocation2 + $0x28] sm:$0xff]
    %v908 = vld [vmem:[#allocation2 + $0x30] sm:$0xff]
    %v909 = vld [vmem:[#allocation2 + $0x38] sm:$0xff]
    %v910 = vld [vmem:[#allocation2 + $0x40] sm:$0xff]
    %v911 = vld [vmem:[#allocation2 + $0x48] sm:$0xff]
    %v912 = vld [vmem:[#allocation2 + $0x50] sm:$0xff]
    %v913 = vld [vmem:[#allocation2 + $0x58] sm:$0xff]
    %v914 = vld [vmem:[#allocation2 + $0x60] sm:$0xff]
    %v915 = vld [vmem:[#allocation2 + $0x68] sm:$0xff]
    %v916 = vld [vmem:[#allocation2 + $0x70] sm:$0xff]
    %v917 = vld [vmem:[#allocation2 + $0x78] sm:$0xff]
    %v918 = vld [vmem:[#allocation2 + $0x80] sm:$0xff]
    %v919 = vld [vmem:[#allocation2 + $0x88] sm:$0xff]
    %v920 = vld [vmem:[#allocation2 + $0x90] sm:$0xff]
    %v921 = vld [vmem:[#allocation2 + $0x98] sm:$0xff]
    %v922 = vld [vmem:[#allocation2 + $0xa0] sm:$0xff]
    %v923 = vld [vmem:[#allocation2 + $0xa8] sm:$0xff]
    %v924 = vld [vmem:[#allocation2 + $0xb0] sm:$0xff]
    %v925 = vld [vmem:[#allocation2 + $0xb8] sm:$0xff]
    %v926 = vld [vmem:[#allocation2 + $0xc0] sm:$0xff]
    %v927 = vld [vmem:[#allocation2 + $0xc8] sm:$0xff]
    %v928 = vld [vmem:[#allocation2 + $0xd0] sm:$0xff]
    %v929 = vld [vmem:[#allocation2 + $0xd8] sm:$0xff]
    %v930 = vld [vmem:[#allocation2 + $0xe0] sm:$0xff]
    %v931 = vld [vmem:[#allocation2 + $0xe8] sm:$0xff]
    %v932 = vld [vmem:[#allocation2 + $0xf0] sm:$0xff]
    %v933 = vld [vmem:[#allocation2 + $0xf8] sm:$0xff]
    %v934 = vmax.bf16 %v824, 0
    %v935 = vmax.bf16 %v825, 0
    %v936 = vmax.bf16 %v834, 0
    %v937 = vmax.bf16 %v835, 0
    %v938 = vmax.bf16 %v844, 0
    %v939 = vmax.bf16 %v845, 0
    %v940 = vmax.bf16 %v854, 0
    %v941 = vmax.bf16 %v855, 0
    %v942 = vmax.bf16 %v864, 0
    %v943 = vmax.bf16 %v865, 0
    %v944 = vmax.bf16 %v874, 0
    %v945 = vmax.bf16 %v875, 0
    %v946 = vmax.bf16 %v884, 0
    %v947 = vmax.bf16 %v885, 0
    %v948 = vmax.bf16 %v894, 0
    %v949 = vmax.bf16 %v895, 0
    %v982 = vunpack.c.l.b16 %v902
    %v983 = vunpack.c.h.b16 %v902
    %v984 = vunpack.c.l.b16 %v903
    %v985 = vunpack.c.h.b16 %v903
    %v986 = vunpack.c.l.b16 %v904
    %v987 = vunpack.c.h.b16 %v904
    %v988 = vunpack.c.l.b16 %v905
    %v989 = vunpack.c.h.b16 %v905
    %v990 = vunpack.c.l.b16 %v906
    %v991 = vunpack.c.h.b16 %v906
    %v992 = vunpack.c.l.b16 %v907
    %v993 = vunpack.c.h.b16 %v907
    %v994 = vunpack.c.l.b16 %v908
    %v995 = vunpack.c.h.b16 %v908
    %v996 = vunpack.c.l.b16 %v909
    %v997 = vunpack.c.h.b16 %v909
    %v998 = vunpack.c.l.b16 %v910
    %v999 = vunpack.c.h.b16 %v910
    %v1000 = vunpack.c.l.b16 %v911
    %v1001 = vunpack.c.h.b16 %v911
    %v1002 = vunpack.c.l.b16 %v912
    %v1003 = vunpack.c.h.b16 %v912
    %v1004 = vunpack.c.l.b16 %v913
    %v1005 = vunpack.c.h.b16 %v913
    %v1006 = vunpack.c.l.b16 %v914
    %v1007 = vunpack.c.h.b16 %v914
    %v1008 = vunpack.c.l.b16 %v915
    %v1009 = vunpack.c.h.b16 %v915
    %v1010 = vunpack.c.l.b16 %v916
    %v1011 = vunpack.c.h.b16 %v916
    %v1012 = vunpack.c.l.b16 %v917
    %v1013 = vunpack.c.h.b16 %v917
    %v1014 = vunpack.c.l.b16 %v918
    %v1015 = vunpack.c.h.b16 %v918
    %v1016 = vunpack.c.l.b16 %v919
    %v1017 = vunpack.c.h.b16 %v919
    %v1018 = vunpack.c.l.b16 %v920
    %v1019 = vunpack.c.h.b16 %v920
    %v1020 = vunpack.c.l.b16 %v921
    %v1021 = vunpack.c.h.b16 %v921
    %v1022 = vunpack.c.l.b16 %v922
    %v1023 = vunpack.c.h.b16 %v922
    %v1024 = vunpack.c.l.b16 %v923
    %v1025 = vunpack.c.h.b16 %v923
    %v1026 = vunpack.c.l.b16 %v924
    %v1027 = vunpack.c.h.b16 %v924
    %v1028 = vunpack.c.l.b16 %v925
    %v1029 = vunpack.c.h.b16 %v925
    %v1030 = vunpack.c.l.b16 %v926
    %v1031 = vunpack.c.h.b16 %v926
    %v1032 = vunpack.c.l.b16 %v927
    %v1033 = vunpack.c.h.b16 %v927
    %v1034 = vunpack.c.l.b16 %v928
    %v1035 = vunpack.c.h.b16 %v928
    %v1036 = vunpack.c.l.b16 %v929
    %v1037 = vunpack.c.h.b16 %v929
    %v1038 = vunpack.c.l.b16 %v930
    %v1039 = vunpack.c.h.b16 %v930
    %v1040 = vunpack.c.l.b16 %v931
    %v1041 = vunpack.c.h.b16 %v931
    %v1042 = vunpack.c.l.b16 %v932
    %v1043 = vunpack.c.h.b16 %v932
    %v1044 = vunpack.c.l.b16 %v933
    %v1045 = vunpack.c.h.b16 %v933
    %v1046 = vpack.c.b16 %v984, %v982
    %v1047 = vpack.c.b16 %v985, %v983
    %v1048 = vpack.c.b16 %v988, %v986
    %v1049 = vpack.c.b16 %v989, %v987
    %v1050 = vpack.c.b16 %v992, %v990
    %v1051 = vpack.c.b16 %v993, %v991
    %v1052 = vpack.c.b16 %v996, %v994
    %v1053 = vpack.c.b16 %v997, %v995
    %v1054 = vpack.c.b16 %v1000, %v998
    %v1055 = vpack.c.b16 %v1001, %v999
    %v1056 = vpack.c.b16 %v1004, %v1002
    %v1057 = vpack.c.b16 %v1005, %v1003
    %v1058 = vpack.c.b16 %v1008, %v1006
    %v1059 = vpack.c.b16 %v1009, %v1007
    %v1060 = vpack.c.b16 %v1012, %v1010
    %v1061 = vpack.c.b16 %v1013, %v1011
    %v1062 = vpack.c.b16 %v1016, %v1014
    %v1063 = vpack.c.b16 %v1017, %v1015
    %v1064 = vpack.c.b16 %v1020, %v1018
    %v1065 = vpack.c.b16 %v1021, %v1019
    %v1066 = vpack.c.b16 %v1024, %v1022
    %v1067 = vpack.c.b16 %v1025, %v1023
    %v1068 = vpack.c.b16 %v1028, %v1026
    %v1069 = vpack.c.b16 %v1029, %v1027
    %v1070 = vpack.c.b16 %v1032, %v1030
    %v1071 = vpack.c.b16 %v1033, %v1031
    %v1072 = vpack.c.b16 %v1036, %v1034
    %v1073 = vpack.c.b16 %v1037, %v1035
    %v1074 = vpack.c.b16 %v1040, %v1038
    %v1075 = vpack.c.b16 %v1041, %v1039
    %v1076 = vpack.c.b16 %v1044, %v1042
    %v1077 = vpack.c.b16 %v1045, %v1043
    %1110 = vmatprep.subr.bf16.mxu0 %v1047
    %1111 = vmatpush1.bf16.msra.mxu0 %v1046
    %1112 = vmatprep.subr.bf16.mxu0 %v1049
    %1113 = vmatpush1.bf16.msra.mxu0 %v1048
    %1114 = vmatprep.subr.bf16.mxu0 %v1051
    %1115 = vmatpush1.bf16.msra.mxu0 %v1050
    %1116 = vmatprep.subr.bf16.mxu0 %v1053
    %1117 = vmatpush1.bf16.msra.mxu0 %v1052
    %1118 = vmatprep.subr.bf16.mxu0 %v1055
    %1119 = vmatpush1.bf16.msra.mxu0 %v1054
    %1120 = vmatprep.subr.bf16.mxu0 %v1057
    %1121 = vmatpush1.bf16.msra.mxu0 %v1056
    %1122 = vmatprep.subr.bf16.mxu0 %v1059
    %1123 = vmatpush1.bf16.msra.mxu0 %v1058
    %1124 = vmatprep.subr.bf16.mxu0 %v1061
    %1125 = vmatpush1.bf16.msra.mxu0 %v1060
    %1126 = vmatprep.subr.bf16.mxu0 %v1063
    %1127 = vmatpush1.bf16.msra.mxu0 %v1062
    %1128 = vmatprep.subr.bf16.mxu0 %v1065
    %1129 = vmatpush1.bf16.msra.mxu0 %v1064
    %1130 = vmatprep.subr.bf16.mxu0 %v1067
    %1131 = vmatpush1.bf16.msra.mxu0 %v1066
    %1132 = vmatprep.subr.bf16.mxu0 %v1069
    %1133 = vmatpush1.bf16.msra.mxu0 %v1068
    %1134 = vmatprep.subr.bf16.mxu0 %v1071
    %1135 = vmatpush1.bf16.msra.mxu0 %v1070
    %1136 = vmatprep.subr.bf16.mxu0 %v1073
    %1137 = vmatpush1.bf16.msra.mxu0 %v1072
    %1138 = vmatprep.subr.bf16.mxu0 %v1075
    %1139 = vmatpush1.bf16.msra.mxu0 %v1074
    %1140 = vmatprep.subr.bf16.mxu0 %v1077
    %1141 = vmatpush1.bf16.msra.mxu0 %v1076
    %1142 = vmatprep.mubr.bf16.mxu0 %v935
    %1143 = vmatmul.mubr.bf16.gmra.mrb[0].mxu0 %v934
    %v1144 = vpop.f32.mrb[0].mxu0
    %v1145 = vadd.f32 0.0, %v1144
    %v1146 = vpop.f32.mrb[0].mxu0
    %v1147 = vadd.f32 0.0, %v1146
    %v1148 = vpop.f32.mrb[0].mxu0
    %v1149 = vadd.f32 0.0, %v1148
    %v1150 = vpop.f32.mrb[0].mxu0
    %v1151 = vadd.f32 0.0, %v1150
    %1152 = vmatprep.mubr.bf16.mxu0 %v937
    %1153 = vmatmul.mubr.bf16.gmra.mrb[0].mxu0 %v936
    %v1154 = vpop.f32.mrb[0].mxu0
    %v1155 = vadd.f32 0.0, %v1154
    %v1156 = vpop.f32.mrb[0].mxu0
    %v1157 = vadd.f32 0.0, %v1156
    %v1158 = vpop.f32.mrb[0].mxu0
    %v1159 = vadd.f32 0.0, %v1158
    %v1160 = vpop.f32.mrb[0].mxu0
    %v1161 = vadd.f32 0.0, %v1160
    %1162 = vmatprep.mubr.bf16.mxu0 %v939
    %1163 = vmatmul.mubr.bf16.gmra.mrb[0].mxu0 %v938
    %v1164 = vpop.f32.mrb[0].mxu0
    %v1165 = vadd.f32 0.0, %v1164
    %v1166 = vpop.f32.mrb[0].mxu0
    %v1167 = vadd.f32 0.0, %v1166
    %v1168 = vpop.f32.mrb[0].mxu0
    %v1169 = vadd.f32 0.0, %v1168
    %v1170 = vpop.f32.mrb[0].mxu0
    %v1171 = vadd.f32 0.0, %v1170
    %1172 = vmatprep.mubr.bf16.mxu0 %v941
    %1173 = vmatmul.mubr.bf16.gmra.mrb[0].mxu0 %v940
    %v1174 = vpop.f32.mrb[0].mxu0
    %v1175 = vadd.f32 0.0, %v1174
    %v1176 = vpop.f32.mrb[0].mxu0
    %v1177 = vadd.f32 0.0, %v1176
    %v1178 = vpop.f32.mrb[0].mxu0
    %v1179 = vadd.f32 0.0, %v1178
    %v1180 = vpop.f32.mrb[0].mxu0
    %v1181 = vadd.f32 0.0, %v1180
    %1182 = vmatprep.mubr.bf16.mxu0 %v943
    %1183 = vmatmul.mubr.bf16.gmra.mrb[0].mxu0 %v942
    %v1184 = vpop.f32.mrb[0].mxu0
    %v1185 = vadd.f32 0.0, %v1184
    %v1186 = vpop.f32.mrb[0].mxu0
    %v1187 = vadd.f32 0.0, %v1186
    %v1188 = vpop.f32.mrb[0].mxu0
    %v1189 = vadd.f32 0.0, %v1188
    %v1190 = vpop.f32.mrb[0].mxu0
    %v1191 = vadd.f32 0.0, %v1190
    %1192 = vmatprep.mubr.bf16.mxu0 %v945
    %1193 = vmatmul.mubr.bf16.gmra.mrb[0].mxu0 %v944
    %v1194 = vpop.f32.mrb[0].mxu0
    %v1195 = vadd.f32 0.0, %v1194
    %v1196 = vpop.f32.mrb[0].mxu0
    %v1197 = vadd.f32 0.0, %v1196
    %v1198 = vpop.f32.mrb[0].mxu0
    %v1199 = vadd.f32 0.0, %v1198
    %v1200 = vpop.f32.mrb[0].mxu0
    %v1201 = vadd.f32 0.0, %v1200
    %1202 = vmatprep.mubr.bf16.mxu0 %v947
    %1203 = vmatmul.mubr.bf16.gmra.mrb[0].mxu0 %v946
    %v1204 = vpop.f32.mrb[0].mxu0
    %v1205 = vadd.f32 0.0, %v1204
    %v1206 = vpop.f32.mrb[0].mxu0
    %v1207 = vadd.f32 0.0, %v1206
    %v1208 = vpop.f32.mrb[0].mxu0
    %v1209 = vadd.f32 0.0, %v1208
    %v1210 = vpop.f32.mrb[0].mxu0
    %v1211 = vadd.f32 0.0, %v1210
    %1212 = vmatprep.mubr.bf16.mxu0 %v949
    %1213 = vmatmul.mubr.bf16.gmra.mrb[0].mxu0 %v948
    %v1214 = vpop.f32.mrb[0].mxu0
    %v1215 = vadd.f32 0.0, %v1214
    %v1216 = vpop.f32.mrb[0].mxu0
    %v1217 = vadd.f32 0.0, %v1216
    %v1218 = vpop.f32.mrb[0].mxu0
    %v1219 = vadd.f32 0.0, %v1218
    %v1220 = vpop.f32.mrb[0].mxu0
    %v1221 = vadd.f32 0.0, %v1220
    %1222 = vdwg.mxu0
    %v1223 = vpack.c.bf16 %v1149, %v1145
    %v1224 = vpack.c.bf16 %v1151, %v1147
    %v1225 = vpack.c.bf16 %v1159, %v1155
    %v1226 = vpack.c.bf16 %v1161, %v1157
    %v1227 = vpack.c.bf16 %v1169, %v1165
    %v1228 = vpack.c.bf16 %v1171, %v1167
    %v1229 = vpack.c.bf16 %v1179, %v1175
    %v1230 = vpack.c.bf16 %v1181, %v1177
    %v1231 = vpack.c.bf16 %v1189, %v1185
    %v1232 = vpack.c.bf16 %v1191, %v1187
    %v1233 = vpack.c.bf16 %v1199, %v1195
    %v1234 = vpack.c.bf16 %v1201, %v1197
    %v1235 = vpack.c.bf16 %v1209, %v1205
    %v1236 = vpack.c.bf16 %v1211, %v1207
    %v1237 = vpack.c.bf16 %v1219, %v1215
    %v1238 = vpack.c.bf16 %v1221, %v1217
    %v1240 = vunpack.c.l.b16 %v65
    %v1241 = vunpack.c.h.b16 %v65
    %v1242 = vpack.c.b16 %v1240, %v1240
    %v1243 = vpack.c.b16 %v1241, %v1241
    %v1245 = vpack.i.b16 %v1242, %v1242
    %v1247 = vlaneseq
    %v1248 = vshrl.u32 %v1247, 7
    %v1249 = vsub.s32 0, %v1248
    %v1250 = vrot.slane %v1245, %v1249
    %v1252 = vpack.i.b16 %v1243, %v1243
    %v1254 = vlaneseq
    %v1255 = vshrl.u32 %v1254, 7
    %v1256 = vsub.s32 0, %v1255
    %v1257 = vrot.slane %v1252, %v1256
    %v1258 = vadd.bf16 %v1223, %v1250
    %v1259 = vadd.bf16 %v1224, %v1257
    %v1260 = vadd.bf16 %v1225, %v1250
    %v1261 = vadd.bf16 %v1226, %v1257
    %v1262 = vadd.bf16 %v1227, %v1250
    %v1263 = vadd.bf16 %v1228, %v1257
    %v1264 = vadd.bf16 %v1229, %v1250
    %v1265 = vadd.bf16 %v1230, %v1257
    %v1266 = vadd.bf16 %v1231, %v1250
    %v1267 = vadd.bf16 %v1232, %v1257
    %v1268 = vadd.bf16 %v1233, %v1250
    %v1269 = vadd.bf16 %v1234, %v1257
    %v1270 = vadd.bf16 %v1235, %v1250
    %v1271 = vadd.bf16 %v1236, %v1257
    %v1272 = vadd.bf16 %v1237, %v1250
    %v1273 = vadd.bf16 %v1238, %v1257
    %v1274 = vmax.bf16 %v1258, 0
    %v1275 = vmax.bf16 %v1259, 0
    %v1276 = vmax.bf16 %v1260, 0
    %v1277 = vmax.bf16 %v1261, 0
    %v1278 = vmax.bf16 %v1262, 0
    %v1279 = vmax.bf16 %v1263, 0
    %v1280 = vmax.bf16 %v1264, 0
    %v1281 = vmax.bf16 %v1265, 0
    %v1282 = vmax.bf16 %v1266, 0
    %v1283 = vmax.bf16 %v1267, 0
    %v1284 = vmax.bf16 %v1268, 0
    %v1285 = vmax.bf16 %v1269, 0
    %v1286 = vmax.bf16 %v1270, 0
    %v1287 = vmax.bf16 %v1271, 0
    %v1288 = vmax.bf16 %v1272, 0
    %v1289 = vmax.bf16 %v1273, 0
    %v1290 = vmax.bf16 %v826, 0
    %v1291 = vmax.bf16 %v827, 0
    %v1292 = vmax.bf16 %v836, 0
    %v1293 = vmax.bf16 %v837, 0
    %v1294 = vmax.bf16 %v846, 0
    %v1295 = vmax.bf16 %v847, 0
    %v1296 = vmax.bf16 %v856, 0
    %v1297 = vmax.bf16 %v857, 0
    %v1298 = vmax.bf16 %v866, 0
    %v1299 = vmax.bf16 %v867, 0
    %v1300 = vmax.bf16 %v876, 0
    %v1301 = vmax.bf16 %v877, 0
    %v1302 = vmax.bf16 %v886, 0
    %v1303 = vmax.bf16 %v887, 0
    %v1304 = vmax.bf16 %v896, 0
    %v1305 = vmax.bf16 %v897, 0
    %1306 = vmatprep.subr.bf16.mxu0 %v1047
    %1307 = vmatpush1.bf16.msra.mxu0 %v1046
    %1308 = vmatprep.subr.bf16.mxu0 %v1049
    %1309 = vmatpush1.bf16.msra.mxu0 %v1048
    %1310 = vmatprep.subr.bf16.mxu0 %v1051
    %1311 = vmatpush1.bf16.msra.mxu0 %v1050
    %1312 = vmatprep.subr.bf16.mxu0 %v1053
    %1313 = vmatpush1.bf16.msra.mxu0 %v1052
    %1314 = vmatprep.subr.bf16.mxu0 %v1055
    %1315 = vmatpush1.bf16.msra.mxu0 %v1054
    %1316 = vmatprep.subr.bf16.mxu0 %v1057
    %1317 = vmatpush1.bf16.msra.mxu0 %v1056
    %1318 = vmatprep.subr.bf16.mxu0 %v1059
    %1319 = vmatpush1.bf16.msra.mxu0 %v1058
    %1320 = vmatprep.subr.bf16.mxu0 %v1061
    %1321 = vmatpush1.bf16.msra.mxu0 %v1060
    %1322 = vmatprep.subr.bf16.mxu0 %v1063
    %1323 = vmatpush1.bf16.msra.mxu0 %v1062
    %1324 = vmatprep.subr.bf16.mxu0 %v1065
    %1325 = vmatpush1.bf16.msra.mxu0 %v1064
    %1326 = vmatprep.subr.bf16.mxu0 %v1067
    %1327 = vmatpush1.bf16.msra.mxu0 %v1066
    %1328 = vmatprep.subr.bf16.mxu0 %v1069
    %1329 = vmatpush1.bf16.msra.mxu0 %v1068
    %1330 = vmatprep.subr.bf16.mxu0 %v1071
    %1331 = vmatpush1.bf16.msra.mxu0 %v1070
    %1332 = vmatprep.subr.bf16.mxu0 %v1073
    %1333 = vmatpush1.bf16.msra.mxu0 %v1072
    %1334 = vmatprep.subr.bf16.mxu0 %v1075
    %1335 = vmatpush1.bf16.msra.mxu0 %v1074
    %1336 = vmatprep.subr.bf16.mxu0 %v1077
    %1337 = vmatpush1.bf16.msra.mxu0 %v1076
    %1338 = vmatprep.mubr.bf16.mxu0 %v1291
    %1339 = vmatmul.mubr.bf16.gmra.mrb[0].mxu0 %v1290
    %v1340 = vpop.f32.mrb[0].mxu0
    %v1341 = vadd.f32 0.0, %v1340
    %v1342 = vpop.f32.mrb[0].mxu0
    %v1343 = vadd.f32 0.0, %v1342
    %v1344 = vpop.f32.mrb[0].mxu0
    %v1345 = vadd.f32 0.0, %v1344
    %v1346 = vpop.f32.mrb[0].mxu0
    %v1347 = vadd.f32 0.0, %v1346
    %1348 = vmatprep.mubr.bf16.mxu0 %v1293
    %1349 = vmatmul.mubr.bf16.gmra.mrb[0].mxu0 %v1292
    %v1350 = vpop.f32.mrb[0].mxu0
    %v1351 = vadd.f32 0.0, %v1350
    %v1352 = vpop.f32.mrb[0].mxu0
    %v1353 = vadd.f32 0.0, %v1352
    %v1354 = vpop.f32.mrb[0].mxu0
    %v1355 = vadd.f32 0.0, %v1354
    %v1356 = vpop.f32.mrb[0].mxu0
    %v1357 = vadd.f32 0.0, %v1356
    %1358 = vmatprep.mubr.bf16.mxu0 %v1295
    %1359 = vmatmul.mubr.bf16.gmra.mrb[0].mxu0 %v1294
    %v1360 = vpop.f32.mrb[0].mxu0
    %v1361 = vadd.f32 0.0, %v1360
    %v1362 = vpop.f32.mrb[0].mxu0
    %v1363 = vadd.f32 0.0, %v1362
    %v1364 = vpop.f32.mrb[0].mxu0
    %v1365 = vadd.f32 0.0, %v1364
    %v1366 = vpop.f32.mrb[0].mxu0
    %v1367 = vadd.f32 0.0, %v1366
    %1368 = vmatprep.mubr.bf16.mxu0 %v1297
    %1369 = vmatmul.mubr.bf16.gmra.mrb[0].mxu0 %v1296
    %v1370 = vpop.f32.mrb[0].mxu0
    %v1371 = vadd.f32 0.0, %v1370
    %v1372 = vpop.f32.mrb[0].mxu0
    %v1373 = vadd.f32 0.0, %v1372
    %v1374 = vpop.f32.mrb[0].mxu0
    %v1375 = vadd.f32 0.0, %v1374
    %v1376 = vpop.f32.mrb[0].mxu0
    %v1377 = vadd.f32 0.0, %v1376
    %1378 = vmatprep.mubr.bf16.mxu0 %v1299
    %1379 = vmatmul.mubr.bf16.gmra.mrb[0].mxu0 %v1298
    %v1380 = vpop.f32.mrb[0].mxu0
    %v1381 = vadd.f32 0.0, %v1380
    %v1382 = vpop.f32.mrb[0].mxu0
    %v1383 = vadd.f32 0.0, %v1382
    %v1384 = vpop.f32.mrb[0].mxu0
    %v1385 = vadd.f32 0.0, %v1384
    %v1386 = vpop.f32.mrb[0].mxu0
    %v1387 = vadd.f32 0.0, %v1386
    %1388 = vmatprep.mubr.bf16.mxu0 %v1301
    %1389 = vmatmul.mubr.bf16.gmra.mrb[0].mxu0 %v1300
    %v1390 = vpop.f32.mrb[0].mxu0
    %v1391 = vadd.f32 0.0, %v1390
    %v1392 = vpop.f32.mrb[0].mxu0
    %v1393 = vadd.f32 0.0, %v1392
    %v1394 = vpop.f32.mrb[0].mxu0
    %v1395 = vadd.f32 0.0, %v1394
    %v1396 = vpop.f32.mrb[0].mxu0
    %v1397 = vadd.f32 0.0, %v1396
    %1398 = vmatprep.mubr.bf16.mxu0 %v1303
    %1399 = vmatmul.mubr.bf16.gmra.mrb[0].mxu0 %v1302
    %v1400 = vpop.f32.mrb[0].mxu0
    %v1401 = vadd.f32 0.0, %v1400
    %v1402 = vpop.f32.mrb[0].mxu0
    %v1403 = vadd.f32 0.0, %v1402
    %v1404 = vpop.f32.mrb[0].mxu0
    %v1405 = vadd.f32 0.0, %v1404
    %v1406 = vpop.f32.mrb[0].mxu0
    %v1407 = vadd.f32 0.0, %v1406
    %1408 = vmatprep.mubr.bf16.mxu0 %v1305
    %1409 = vmatmul.mubr.bf16.gmra.mrb[0].mxu0 %v1304
    %v1410 = vpop.f32.mrb[0].mxu0
    %v1411 = vadd.f32 0.0, %v1410
    %v1412 = vpop.f32.mrb[0].mxu0
    %v1413 = vadd.f32 0.0, %v1412
    %v1414 = vpop.f32.mrb[0].mxu0
    %v1415 = vadd.f32 0.0, %v1414
    %v1416 = vpop.f32.mrb[0].mxu0
    %v1417 = vadd.f32 0.0, %v1416
    %1418 = vdwg.mxu0
    %v1419 = vpack.c.bf16 %v1345, %v1341
    %v1420 = vpack.c.bf16 %v1347, %v1343
    %v1421 = vpack.c.bf16 %v1355, %v1351
    %v1422 = vpack.c.bf16 %v1357, %v1353
    %v1423 = vpack.c.bf16 %v1365, %v1361
    %v1424 = vpack.c.bf16 %v1367, %v1363
    %v1425 = vpack.c.bf16 %v1375, %v1371
    %v1426 = vpack.c.bf16 %v1377, %v1373
    %v1427 = vpack.c.bf16 %v1385, %v1381
    %v1428 = vpack.c.bf16 %v1387, %v1383
    %v1429 = vpack.c.bf16 %v1395, %v1391
    %v1430 = vpack.c.bf16 %v1397, %v1393
    %v1431 = vpack.c.bf16 %v1405, %v1401
    %v1432 = vpack.c.bf16 %v1407, %v1403
    %v1433 = vpack.c.bf16 %v1415, %v1411
    %v1434 = vpack.c.bf16 %v1417, %v1413
    %v1435 = vadd.bf16 %v1419, %v1250
    %v1436 = vadd.bf16 %v1420, %v1257
    %v1437 = vadd.bf16 %v1421, %v1250
    %v1438 = vadd.bf16 %v1422, %v1257
    %v1439 = vadd.bf16 %v1423, %v1250
    %v1440 = vadd.bf16 %v1424, %v1257
    %v1441 = vadd.bf16 %v1425, %v1250
    %v1442 = vadd.bf16 %v1426, %v1257
    %v1443 = vadd.bf16 %v1427, %v1250
    %v1444 = vadd.bf16 %v1428, %v1257
    %v1445 = vadd.bf16 %v1429, %v1250
    %v1446 = vadd.bf16 %v1430, %v1257
    %v1447 = vadd.bf16 %v1431, %v1250
    %v1448 = vadd.bf16 %v1432, %v1257
    %v1449 = vadd.bf16 %v1433, %v1250
    %v1450 = vadd.bf16 %v1434, %v1257
    %v1451 = vmax.bf16 %v1435, 0
    %v1452 = vmax.bf16 %v1436, 0
    %v1453 = vmax.bf16 %v1437, 0
    %v1454 = vmax.bf16 %v1438, 0
    %v1455 = vmax.bf16 %v1439, 0
    %v1456 = vmax.bf16 %v1440, 0
    %v1457 = vmax.bf16 %v1441, 0
    %v1458 = vmax.bf16 %v1442, 0
    %v1459 = vmax.bf16 %v1443, 0
    %v1460 = vmax.bf16 %v1444, 0
    %v1461 = vmax.bf16 %v1445, 0
    %v1462 = vmax.bf16 %v1446, 0
    %v1463 = vmax.bf16 %v1447, 0
    %v1464 = vmax.bf16 %v1448, 0
    %v1465 = vmax.bf16 %v1449, 0
    %v1466 = vmax.bf16 %v1450, 0
    %v1467 = vadd.bf16 %v1274, %v1451
    %v1468 = vadd.bf16 %v1275, %v1452
    %v1469 = vadd.bf16 %v1276, %v1453
    %v1470 = vadd.bf16 %v1277, %v1454
    %v1471 = vadd.bf16 %v1278, %v1455
    %v1472 = vadd.bf16 %v1279, %v1456
    %v1473 = vadd.bf16 %v1280, %v1457
    %v1474 = vadd.bf16 %v1281, %v1458
    %v1475 = vadd.bf16 %v1282, %v1459
    %v1476 = vadd.bf16 %v1283, %v1460
    %v1477 = vadd.bf16 %v1284, %v1461
    %v1478 = vadd.bf16 %v1285, %v1462
    %v1479 = vadd.bf16 %v1286, %v1463
    %v1480 = vadd.bf16 %v1287, %v1464
    %v1481 = vadd.bf16 %v1288, %v1465
    %v1482 = vadd.bf16 %v1289, %v1466
    %v1483 = vmax.bf16 %v828, 0
    %v1484 = vmax.bf16 %v829, 0
    %v1485 = vmax.bf16 %v838, 0
    %v1486 = vmax.bf16 %v839, 0
    %v1487 = vmax.bf16 %v848, 0
    %v1488 = vmax.bf16 %v849, 0
    %v1489 = vmax.bf16 %v858, 0
    %v1490 = vmax.bf16 %v859, 0
    %v1491 = vmax.bf16 %v868, 0
    %v1492 = vmax.bf16 %v869, 0
    %v1493 = vmax.bf16 %v878, 0
    %v1494 = vmax.bf16 %v879, 0
    %v1495 = vmax.bf16 %v888, 0
    %v1496 = vmax.bf16 %v889, 0
    %v1497 = vmax.bf16 %v898, 0
    %v1498 = vmax.bf16 %v899, 0
    %1499 = vmatprep.subr.bf16.mxu0 %v1047
    %1500 = vmatpush1.bf16.msra.mxu0 %v1046
    %1501 = vmatprep.subr.bf16.mxu0 %v1049
    %1502 = vmatpush1.bf16.msra.mxu0 %v1048
    %1503 = vmatprep.subr.bf16.mxu0 %v1051
    %1504 = vmatpush1.bf16.msra.mxu0 %v1050
    %1505 = vmatprep.subr.bf16.mxu0 %v1053
    %1506 = vmatpush1.bf16.msra.mxu0 %v1052
    %1507 = vmatprep.subr.bf16.mxu0 %v1055
    %1508 = vmatpush1.bf16.msra.mxu0 %v1054
    %1509 = vmatprep.subr.bf16.mxu0 %v1057
    %1510 = vmatpush1.bf16.msra.mxu0 %v1056
    %1511 = vmatprep.subr.bf16.mxu0 %v1059
    %1512 = vmatpush1.bf16.msra.mxu0 %v1058
    %1513 = vmatprep.subr.bf16.mxu0 %v1061
    %1514 = vmatpush1.bf16.msra.mxu0 %v1060
    %1515 = vmatprep.subr.bf16.mxu0 %v1063
    %1516 = vmatpush1.bf16.msra.mxu0 %v1062
    %1517 = vmatprep.subr.bf16.mxu0 %v1065
    %1518 = vmatpush1.bf16.msra.mxu0 %v1064
    %1519 = vmatprep.subr.bf16.mxu0 %v1067
    %1520 = vmatpush1.bf16.msra.mxu0 %v1066
    %1521 = vmatprep.subr.bf16.mxu0 %v1069
    %1522 = vmatpush1.bf16.msra.mxu0 %v1068
    %1523 = vmatprep.subr.bf16.mxu0 %v1071
    %1524 = vmatpush1.bf16.msra.mxu0 %v1070
    %1525 = vmatprep.subr.bf16.mxu0 %v1073
    %1526 = vmatpush1.bf16.msra.mxu0 %v1072
    %1527 = vmatprep.subr.bf16.mxu0 %v1075
    %1528 = vmatpush1.bf16.msra.mxu0 %v1074
    %1529 = vmatprep.subr.bf16.mxu0 %v1077
    %1530 = vmatpush1.bf16.msra.mxu0 %v1076
    %1531 = vmatprep.mubr.bf16.mxu0 %v1484
    %1532 = vmatmul.mubr.bf16.gmra.mrb[0].mxu0 %v1483
    %v1533 = vpop.f32.mrb[0].mxu0
    %v1534 = vadd.f32 0.0, %v1533
    %v1535 = vpop.f32.mrb[0].mxu0
    %v1536 = vadd.f32 0.0, %v1535
    %v1537 = vpop.f32.mrb[0].mxu0
    %v1538 = vadd.f32 0.0, %v1537
    %v1539 = vpop.f32.mrb[0].mxu0
    %v1540 = vadd.f32 0.0, %v1539
    %1541 = vmatprep.mubr.bf16.mxu0 %v1486
    %1542 = vmatmul.mubr.bf16.gmra.mrb[0].mxu0 %v1485
    %v1543 = vpop.f32.mrb[0].mxu0
    %v1544 = vadd.f32 0.0, %v1543
    %v1545 = vpop.f32.mrb[0].mxu0
    %v1546 = vadd.f32 0.0, %v1545
    %v1547 = vpop.f32.mrb[0].mxu0
    %v1548 = vadd.f32 0.0, %v1547
    %v1549 = vpop.f32.mrb[0].mxu0
    %v1550 = vadd.f32 0.0, %v1549
    %1551 = vmatprep.mubr.bf16.mxu0 %v1488
    %1552 = vmatmul.mubr.bf16.gmra.mrb[0].mxu0 %v1487
    %v1553 = vpop.f32.mrb[0].mxu0
    %v1554 = vadd.f32 0.0, %v1553
    %v1555 = vpop.f32.mrb[0].mxu0
    %v1556 = vadd.f32 0.0, %v1555
    %v1557 = vpop.f32.mrb[0].mxu0
    %v1558 = vadd.f32 0.0, %v1557
    %v1559 = vpop.f32.mrb[0].mxu0
    %v1560 = vadd.f32 0.0, %v1559
    %1561 = vmatprep.mubr.bf16.mxu0 %v1490
    %1562 = vmatmul.mubr.bf16.gmra.mrb[0].mxu0 %v1489
    %v1563 = vpop.f32.mrb[0].mxu0
    %v1564 = vadd.f32 0.0, %v1563
    %v1565 = vpop.f32.mrb[0].mxu0
    %v1566 = vadd.f32 0.0, %v1565
    %v1567 = vpop.f32.mrb[0].mxu0
    %v1568 = vadd.f32 0.0, %v1567
    %v1569 = vpop.f32.mrb[0].mxu0
    %v1570 = vadd.f32 0.0, %v1569
    %1571 = vmatprep.mubr.bf16.mxu0 %v1492
    %1572 = vmatmul.mubr.bf16.gmra.mrb[0].mxu0 %v1491
    %v1573 = vpop.f32.mrb[0].mxu0
    %v1574 = vadd.f32 0.0, %v1573
    %v1575 = vpop.f32.mrb[0].mxu0
    %v1576 = vadd.f32 0.0, %v1575
    %v1577 = vpop.f32.mrb[0].mxu0
    %v1578 = vadd.f32 0.0, %v1577
    %v1579 = vpop.f32.mrb[0].mxu0
    %v1580 = vadd.f32 0.0, %v1579
    %1581 = vmatprep.mubr.bf16.mxu0 %v1494
    %1582 = vmatmul.mubr.bf16.gmra.mrb[0].mxu0 %v1493
    %v1583 = vpop.f32.mrb[0].mxu0
    %v1584 = vadd.f32 0.0, %v1583
    %v1585 = vpop.f32.mrb[0].mxu0
    %v1586 = vadd.f32 0.0, %v1585
    %v1587 = vpop.f32.mrb[0].mxu0
    %v1588 = vadd.f32 0.0, %v1587
    %v1589 = vpop.f32.mrb[0].mxu0
    %v1590 = vadd.f32 0.0, %v1589
    %1591 = vmatprep.mubr.bf16.mxu0 %v1496
    %1592 = vmatmul.mubr.bf16.gmra.mrb[0].mxu0 %v1495
    %v1593 = vpop.f32.mrb[0].mxu0
    %v1594 = vadd.f32 0.0, %v1593
    %v1595 = vpop.f32.mrb[0].mxu0
    %v1596 = vadd.f32 0.0, %v1595
    %v1597 = vpop.f32.mrb[0].mxu0
    %v1598 = vadd.f32 0.0, %v1597
    %v1599 = vpop.f32.mrb[0].mxu0
    %v1600 = vadd.f32 0.0, %v1599
    %1601 = vmatprep.mubr.bf16.mxu0 %v1498
    %1602 = vmatmul.mubr.bf16.gmra.mrb[0].mxu0 %v1497
    %v1603 = vpop.f32.mrb[0].mxu0
    %v1604 = vadd.f32 0.0, %v1603
    %v1605 = vpop.f32.mrb[0].mxu0
    %v1606 = vadd.f32 0.0, %v1605
    %v1607 = vpop.f32.mrb[0].mxu0
    %v1608 = vadd.f32 0.0, %v1607
    %v1609 = vpop.f32.mrb[0].mxu0
    %v1610 = vadd.f32 0.0, %v1609
    %1611 = vdwg.mxu0
    %v1612 = vpack.c.bf16 %v1538, %v1534
    %v1613 = vpack.c.bf16 %v1540, %v1536
    %v1614 = vpack.c.bf16 %v1548, %v1544
    %v1615 = vpack.c.bf16 %v1550, %v1546
    %v1616 = vpack.c.bf16 %v1558, %v1554
    %v1617 = vpack.c.bf16 %v1560, %v1556
    %v1618 = vpack.c.bf16 %v1568, %v1564
    %v1619 = vpack.c.bf16 %v1570, %v1566
    %v1620 = vpack.c.bf16 %v1578, %v1574
    %v1621 = vpack.c.bf16 %v1580, %v1576
    %v1622 = vpack.c.bf16 %v1588, %v1584
    %v1623 = vpack.c.bf16 %v1590, %v1586
    %v1624 = vpack.c.bf16 %v1598, %v1594
    %v1625 = vpack.c.bf16 %v1600, %v1596
    %v1626 = vpack.c.bf16 %v1608, %v1604
    %v1627 = vpack.c.bf16 %v1610, %v1606
    %v1628 = vadd.bf16 %v1612, %v1250
    %v1629 = vadd.bf16 %v1613, %v1257
    %v1630 = vadd.bf16 %v1614, %v1250
    %v1631 = vadd.bf16 %v1615, %v1257
    %v1632 = vadd.bf16 %v1616, %v1250
    %v1633 = vadd.bf16 %v1617, %v1257
    %v1634 = vadd.bf16 %v1618, %v1250
    %v1635 = vadd.bf16 %v1619, %v1257
    %v1636 = vadd.bf16 %v1620, %v1250
    %v1637 = vadd.bf16 %v1621, %v1257
    %v1638 = vadd.bf16 %v1622, %v1250
    %v1639 = vadd.bf16 %v1623, %v1257
    %v1640 = vadd.bf16 %v1624, %v1250
    %v1641 = vadd.bf16 %v1625, %v1257
    %v1642 = vadd.bf16 %v1626, %v1250
    %v1643 = vadd.bf16 %v1627, %v1257
    %v1644 = vmax.bf16 %v1628, 0
    %v1645 = vmax.bf16 %v1629, 0
    %v1646 = vmax.bf16 %v1630, 0
    %v1647 = vmax.bf16 %v1631, 0
    %v1648 = vmax.bf16 %v1632, 0
    %v1649 = vmax.bf16 %v1633, 0
    %v1650 = vmax.bf16 %v1634, 0
    %v1651 = vmax.bf16 %v1635, 0
    %v1652 = vmax.bf16 %v1636, 0
    %v1653 = vmax.bf16 %v1637, 0
    %v1654 = vmax.bf16 %v1638, 0
    %v1655 = vmax.bf16 %v1639, 0
    %v1656 = vmax.bf16 %v1640, 0
    %v1657 = vmax.bf16 %v1641, 0
    %v1658 = vmax.bf16 %v1642, 0
    %v1659 = vmax.bf16 %v1643, 0
    %v1660 = vadd.bf16 %v1467, %v1644
    %v1661 = vadd.bf16 %v1468, %v1645
    %v1662 = vadd.bf16 %v1469, %v1646
    %v1663 = vadd.bf16 %v1470, %v1647
    %v1664 = vadd.bf16 %v1471, %v1648
    %v1665 = vadd.bf16 %v1472, %v1649
    %v1666 = vadd.bf16 %v1473, %v1650
    %v1667 = vadd.bf16 %v1474, %v1651
    %v1668 = vadd.bf16 %v1475, %v1652
    %v1669 = vadd.bf16 %v1476, %v1653
    %v1670 = vadd.bf16 %v1477, %v1654
    %v1671 = vadd.bf16 %v1478, %v1655
    %v1672 = vadd.bf16 %v1479, %v1656
    %v1673 = vadd.bf16 %v1480, %v1657
    %v1674 = vadd.bf16 %v1481, %v1658
    %v1675 = vadd.bf16 %v1482, %v1659
    %v1676 = vmax.bf16 %v830, 0
    %v1677 = vmax.bf16 %v831, 0
    %v1678 = vmax.bf16 %v840, 0
    %v1679 = vmax.bf16 %v841, 0
    %v1680 = vmax.bf16 %v850, 0
    %v1681 = vmax.bf16 %v851, 0
    %v1682 = vmax.bf16 %v860, 0
    %v1683 = vmax.bf16 %v861, 0
    %v1684 = vmax.bf16 %v870, 0
    %v1685 = vmax.bf16 %v871, 0
    %v1686 = vmax.bf16 %v880, 0
    %v1687 = vmax.bf16 %v881, 0
    %v1688 = vmax.bf16 %v890, 0
    %v1689 = vmax.bf16 %v891, 0
    %v1690 = vmax.bf16 %v900, 0
    %v1691 = vmax.bf16 %v901, 0
    %1692 = vmatprep.subr.bf16.mxu0 %v1047
    %1693 = vmatpush1.bf16.msra.mxu0 %v1046
    %1694 = vmatprep.subr.bf16.mxu0 %v1049
    %1695 = vmatpush1.bf16.msra.mxu0 %v1048
    %1696 = vmatprep.subr.bf16.mxu0 %v1051
    %1697 = vmatpush1.bf16.msra.mxu0 %v1050
    %1698 = vmatprep.subr.bf16.mxu0 %v1053
    %1699 = vmatpush1.bf16.msra.mxu0 %v1052
    %1700 = vmatprep.subr.bf16.mxu0 %v1055
    %1701 = vmatpush1.bf16.msra.mxu0 %v1054
    %1702 = vmatprep.subr.bf16.mxu0 %v1057
    %1703 = vmatpush1.bf16.msra.mxu0 %v1056
    %1704 = vmatprep.subr.bf16.mxu0 %v1059
    %1705 = vmatpush1.bf16.msra.mxu0 %v1058
    %1706 = vmatprep.subr.bf16.mxu0 %v1061
    %1707 = vmatpush1.bf16.msra.mxu0 %v1060
    %1708 = vmatprep.subr.bf16.mxu0 %v1063
    %1709 = vmatpush1.bf16.msra.mxu0 %v1062
    %1710 = vmatprep.subr.bf16.mxu0 %v1065
    %1711 = vmatpush1.bf16.msra.mxu0 %v1064
    %1712 = vmatprep.subr.bf16.mxu0 %v1067
    %1713 = vmatpush1.bf16.msra.mxu0 %v1066
    %1714 = vmatprep.subr.bf16.mxu0 %v1069
    %1715 = vmatpush1.bf16.msra.mxu0 %v1068
    %1716 = vmatprep.subr.bf16.mxu0 %v1071
    %1717 = vmatpush1.bf16.msra.mxu0 %v1070
    %1718 = vmatprep.subr.bf16.mxu0 %v1073
    %1719 = vmatpush1.bf16.msra.mxu0 %v1072
    %1720 = vmatprep.subr.bf16.mxu0 %v1075
    %1721 = vmatpush1.bf16.msra.mxu0 %v1074
    %1722 = vmatprep.subr.bf16.mxu0 %v1077
    %1723 = vmatpush1.bf16.msra.mxu0 %v1076
    %1724 = vmatprep.mubr.bf16.mxu0 %v1677
    %1725 = vmatmul.mubr.bf16.gmra.mrb[0].mxu0 %v1676
    %v1726 = vpop.f32.mrb[0].mxu0
    %v1727 = vadd.f32 0.0, %v1726
    %v1728 = vpop.f32.mrb[0].mxu0
    %v1729 = vadd.f32 0.0, %v1728
    %v1730 = vpop.f32.mrb[0].mxu0
    %v1731 = vadd.f32 0.0, %v1730
    %v1732 = vpop.f32.mrb[0].mxu0
    %v1733 = vadd.f32 0.0, %v1732
    %1734 = vmatprep.mubr.bf16.mxu0 %v1679
    %1735 = vmatmul.mubr.bf16.gmra.mrb[0].mxu0 %v1678
    %v1736 = vpop.f32.mrb[0].mxu0
    %v1737 = vadd.f32 0.0, %v1736
    %v1738 = vpop.f32.mrb[0].mxu0
    %v1739 = vadd.f32 0.0, %v1738
    %v1740 = vpop.f32.mrb[0].mxu0
    %v1741 = vadd.f32 0.0, %v1740
    %v1742 = vpop.f32.mrb[0].mxu0
    %v1743 = vadd.f32 0.0, %v1742
    %1744 = vmatprep.mubr.bf16.mxu0 %v1681
    %1745 = vmatmul.mubr.bf16.gmra.mrb[0].mxu0 %v1680
    %v1746 = vpop.f32.mrb[0].mxu0
    %v1747 = vadd.f32 0.0, %v1746
    %v1748 = vpop.f32.mrb[0].mxu0
    %v1749 = vadd.f32 0.0, %v1748
    %v1750 = vpop.f32.mrb[0].mxu0
    %v1751 = vadd.f32 0.0, %v1750
    %v1752 = vpop.f32.mrb[0].mxu0
    %v1753 = vadd.f32 0.0, %v1752
    %1754 = vmatprep.mubr.bf16.mxu0 %v1683
    %1755 = vmatmul.mubr.bf16.gmra.mrb[0].mxu0 %v1682
    %v1756 = vpop.f32.mrb[0].mxu0
    %v1757 = vadd.f32 0.0, %v1756
    %v1758 = vpop.f32.mrb[0].mxu0
    %v1759 = vadd.f32 0.0, %v1758
    %v1760 = vpop.f32.mrb[0].mxu0
    %v1761 = vadd.f32 0.0, %v1760
    %v1762 = vpop.f32.mrb[0].mxu0
    %v1763 = vadd.f32 0.0, %v1762
    %1764 = vmatprep.mubr.bf16.mxu0 %v1685
    %1765 = vmatmul.mubr.bf16.gmra.mrb[0].mxu0 %v1684
    %v1766 = vpop.f32.mrb[0].mxu0
    %v1767 = vadd.f32 0.0, %v1766
    %v1768 = vpop.f32.mrb[0].mxu0
    %v1769 = vadd.f32 0.0, %v1768
    %v1770 = vpop.f32.mrb[0].mxu0
    %v1771 = vadd.f32 0.0, %v1770
    %v1772 = vpop.f32.mrb[0].mxu0
    %v1773 = vadd.f32 0.0, %v1772
    %1774 = vmatprep.mubr.bf16.mxu0 %v1687
    %1775 = vmatmul.mubr.bf16.gmra.mrb[0].mxu0 %v1686
    %v1776 = vpop.f32.mrb[0].mxu0
    %v1777 = vadd.f32 0.0, %v1776
    %v1778 = vpop.f32.mrb[0].mxu0
    %v1779 = vadd.f32 0.0, %v1778
    %v1780 = vpop.f32.mrb[0].mxu0
    %v1781 = vadd.f32 0.0, %v1780
    %v1782 = vpop.f32.mrb[0].mxu0
    %v1783 = vadd.f32 0.0, %v1782
    %1784 = vmatprep.mubr.bf16.mxu0 %v1689
    %1785 = vmatmul.mubr.bf16.gmra.mrb[0].mxu0 %v1688
    %v1786 = vpop.f32.mrb[0].mxu0
    %v1787 = vadd.f32 0.0, %v1786
    %v1788 = vpop.f32.mrb[0].mxu0
    %v1789 = vadd.f32 0.0, %v1788
    %v1790 = vpop.f32.mrb[0].mxu0
    %v1791 = vadd.f32 0.0, %v1790
    %v1792 = vpop.f32.mrb[0].mxu0
    %v1793 = vadd.f32 0.0, %v1792
    %1794 = vmatprep.mubr.bf16.mxu0 %v1691
    %1795 = vmatmul.mubr.bf16.gmra.mrb[0].mxu0 %v1690
    %v1796 = vpop.f32.mrb[0].mxu0
    %v1797 = vadd.f32 0.0, %v1796
    %v1798 = vpop.f32.mrb[0].mxu0
    %v1799 = vadd.f32 0.0, %v1798
    %v1800 = vpop.f32.mrb[0].mxu0
    %v1801 = vadd.f32 0.0, %v1800
    %v1802 = vpop.f32.mrb[0].mxu0
    %v1803 = vadd.f32 0.0, %v1802
    %1804 = vdwg.mxu0
    %v1805 = vpack.c.bf16 %v1731, %v1727
    %v1806 = vpack.c.bf16 %v1733, %v1729
    %v1807 = vpack.c.bf16 %v1741, %v1737
    %v1808 = vpack.c.bf16 %v1743, %v1739
    %v1809 = vpack.c.bf16 %v1751, %v1747
    %v1810 = vpack.c.bf16 %v1753, %v1749
    %v1811 = vpack.c.bf16 %v1761, %v1757
    %v1812 = vpack.c.bf16 %v1763, %v1759
    %v1813 = vpack.c.bf16 %v1771, %v1767
    %v1814 = vpack.c.bf16 %v1773, %v1769
    %v1815 = vpack.c.bf16 %v1781, %v1777
    %v1816 = vpack.c.bf16 %v1783, %v1779
    %v1817 = vpack.c.bf16 %v1791, %v1787
    %v1818 = vpack.c.bf16 %v1793, %v1789
    %v1819 = vpack.c.bf16 %v1801, %v1797
    %v1820 = vpack.c.bf16 %v1803, %v1799
    %v1821 = vadd.bf16 %v1805, %v1250
    %v1822 = vadd.bf16 %v1806, %v1257
    %v1823 = vadd.bf16 %v1807, %v1250
    %v1824 = vadd.bf16 %v1808, %v1257
    %v1825 = vadd.bf16 %v1809, %v1250
    %v1826 = vadd.bf16 %v1810, %v1257
    %v1827 = vadd.bf16 %v1811, %v1250
    %v1828 = vadd.bf16 %v1812, %v1257
    %v1829 = vadd.bf16 %v1813, %v1250
    %v1830 = vadd.bf16 %v1814, %v1257
    %v1831 = vadd.bf16 %v1815, %v1250
    %v1832 = vadd.bf16 %v1816, %v1257
    %v1833 = vadd.bf16 %v1817, %v1250
    %v1834 = vadd.bf16 %v1818, %v1257
    %v1835 = vadd.bf16 %v1819, %v1250
    %v1836 = vadd.bf16 %v1820, %v1257
    %v1837 = vmax.bf16 %v1821, 0
    %v1838 = vmax.bf16 %v1822, 0
    %v1839 = vmax.bf16 %v1823, 0
    %v1840 = vmax.bf16 %v1824, 0
    %v1841 = vmax.bf16 %v1825, 0
    %v1842 = vmax.bf16 %v1826, 0
    %v1843 = vmax.bf16 %v1827, 0
    %v1844 = vmax.bf16 %v1828, 0
    %v1845 = vmax.bf16 %v1829, 0
    %v1846 = vmax.bf16 %v1830, 0
    %v1847 = vmax.bf16 %v1831, 0
    %v1848 = vmax.bf16 %v1832, 0
    %v1849 = vmax.bf16 %v1833, 0
    %v1850 = vmax.bf16 %v1834, 0
    %v1851 = vmax.bf16 %v1835, 0
    %v1852 = vmax.bf16 %v1836, 0
    %v1853 = vadd.bf16 %v1660, %v1837
    %v1854 = vadd.bf16 %v1661, %v1838
    %v1855 = vadd.bf16 %v1662, %v1839
    %v1856 = vadd.bf16 %v1663, %v1840
    %v1857 = vadd.bf16 %v1664, %v1841
    %v1858 = vadd.bf16 %v1665, %v1842
    %v1859 = vadd.bf16 %v1666, %v1843
    %v1860 = vadd.bf16 %v1667, %v1844
    %v1861 = vadd.bf16 %v1668, %v1845
    %v1862 = vadd.bf16 %v1669, %v1846
    %v1863 = vadd.bf16 %v1670, %v1847
    %v1864 = vadd.bf16 %v1671, %v1848
    %v1865 = vadd.bf16 %v1672, %v1849
    %v1866 = vadd.bf16 %v1673, %v1850
    %v1867 = vadd.bf16 %v1674, %v1851
    %v1868 = vadd.bf16 %v1675, %v1852
    %v1869 = vld [vmem:[#allocation4] sm:$0xff]
    %v1870 = vld [vmem:[#allocation4 + $0x8] sm:$0xff]
    %v1871 = vld [vmem:[#allocation4 + $0x10] sm:$0xff]
    %v1872 = vld [vmem:[#allocation4 + $0x18] sm:$0xff]
    %v1873 = vld [vmem:[#allocation4 + $0x20] sm:$0xff]
    %v1874 = vld [vmem:[#allocation4 + $0x28] sm:$0xff]
    %v1875 = vld [vmem:[#allocation4 + $0x30] sm:$0xff]
    %v1876 = vld [vmem:[#allocation4 + $0x38] sm:$0xff]
    %v1877 = vld [vmem:[#allocation4 + $0x40] sm:$0xff]
    %v1878 = vld [vmem:[#allocation4 + $0x48] sm:$0xff]
    %v1879 = vld [vmem:[#allocation4 + $0x50] sm:$0xff]
    %v1880 = vld [vmem:[#allocation4 + $0x58] sm:$0xff]
    %v1881 = vld [vmem:[#allocation4 + $0x60] sm:$0xff]
    %v1882 = vld [vmem:[#allocation4 + $0x68] sm:$0xff]
    %v1883 = vld [vmem:[#allocation4 + $0x70] sm:$0xff]
    %v1884 = vld [vmem:[#allocation4 + $0x78] sm:$0xff]
    %v1885 = vld [vmem:[#allocation4 + $0x80] sm:$0xff]
    %v1886 = vld [vmem:[#allocation4 + $0x88] sm:$0xff]
    %v1887 = vld [vmem:[#allocation4 + $0x90] sm:$0xff]
    %v1888 = vld [vmem:[#allocation4 + $0x98] sm:$0xff]
    %v1889 = vld [vmem:[#allocation4 + $0xa0] sm:$0xff]
    %v1890 = vld [vmem:[#allocation4 + $0xa8] sm:$0xff]
    %v1891 = vld [vmem:[#allocation4 + $0xb0] sm:$0xff]
    %v1892 = vld [vmem:[#allocation4 + $0xb8] sm:$0xff]
    %v1893 = vld [vmem:[#allocation4 + $0xc0] sm:$0xff]
    %v1894 = vld [vmem:[#allocation4 + $0xc8] sm:$0xff]
    %v1895 = vld [vmem:[#allocation4 + $0xd0] sm:$0xff]
    %v1896 = vld [vmem:[#allocation4 + $0xd8] sm:$0xff]
    %v1897 = vld [vmem:[#allocation4 + $0xe0] sm:$0xff]
    %v1898 = vld [vmem:[#allocation4 + $0xe8] sm:$0xff]
    %v1899 = vld [vmem:[#allocation4 + $0xf0] sm:$0xff]
    %v1900 = vld [vmem:[#allocation4 + $0xf8] sm:$0xff]
    %v1933 = vunpack.c.l.b16 %v1869
    %v1934 = vunpack.c.h.b16 %v1869
    %v1935 = vunpack.c.l.b16 %v1870
    %v1936 = vunpack.c.h.b16 %v1870
    %v1937 = vunpack.c.l.b16 %v1871
    %v1938 = vunpack.c.h.b16 %v1871
    %v1939 = vunpack.c.l.b16 %v1872
    %v1940 = vunpack.c.h.b16 %v1872
    %v1941 = vunpack.c.l.b16 %v1873
    %v1942 = vunpack.c.h.b16 %v1873
    %v1943 = vunpack.c.l.b16 %v1874
    %v1944 = vunpack.c.h.b16 %v1874
    %v1945 = vunpack.c.l.b16 %v1875
    %v1946 = vunpack.c.h.b16 %v1875
    %v1947 = vunpack.c.l.b16 %v1876
    %v1948 = vunpack.c.h.b16 %v1876
    %v1949 = vunpack.c.l.b16 %v1877
    %v1950 = vunpack.c.h.b16 %v1877
    %v1951 = vunpack.c.l.b16 %v1878
    %v1952 = vunpack.c.h.b16 %v1878
    %v1953 = vunpack.c.l.b16 %v1879
    %v1954 = vunpack.c.h.b16 %v1879
    %v1955 = vunpack.c.l.b16 %v1880
    %v1956 = vunpack.c.h.b16 %v1880
    %v1957 = vunpack.c.l.b16 %v1881
    %v1958 = vunpack.c.h.b16 %v1881
    %v1959 = vunpack.c.l.b16 %v1882
    %v1960 = vunpack.c.h.b16 %v1882
    %v1961 = vunpack.c.l.b16 %v1883
    %v1962 = vunpack.c.h.b16 %v1883
    %v1963 = vunpack.c.l.b16 %v1884
    %v1964 = vunpack.c.h.b16 %v1884
    %v1965 = vunpack.c.l.b16 %v1885
    %v1966 = vunpack.c.h.b16 %v1885
    %v1967 = vunpack.c.l.b16 %v1886
    %v1968 = vunpack.c.h.b16 %v1886
    %v1969 = vunpack.c.l.b16 %v1887
    %v1970 = vunpack.c.h.b16 %v1887
    %v1971 = vunpack.c.l.b16 %v1888
    %v1972 = vunpack.c.h.b16 %v1888
    %v1973 = vunpack.c.l.b16 %v1889
    %v1974 = vunpack.c.h.b16 %v1889
    %v1975 = vunpack.c.l.b16 %v1890
    %v1976 = vunpack.c.h.b16 %v1890
    %v1977 = vunpack.c.l.b16 %v1891
    %v1978 = vunpack.c.h.b16 %v1891
    %v1979 = vunpack.c.l.b16 %v1892
    %v1980 = vunpack.c.h.b16 %v1892
    %v1981 = vunpack.c.l.b16 %v1893
    %v1982 = vunpack.c.h.b16 %v1893
    %v1983 = vunpack.c.l.b16 %v1894
    %v1984 = vunpack.c.h.b16 %v1894
    %v1985 = vunpack.c.l.b16 %v1895
    %v1986 = vunpack.c.h.b16 %v1895
    %v1987 = vunpack.c.l.b16 %v1896
    %v1988 = vunpack.c.h.b16 %v1896
    %v1989 = vunpack.c.l.b16 %v1897
    %v1990 = vunpack.c.h.b16 %v1897
    %v1991 = vunpack.c.l.b16 %v1898
    %v1992 = vunpack.c.h.b16 %v1898
    %v1993 = vunpack.c.l.b16 %v1899
    %v1994 = vunpack.c.h.b16 %v1899
    %v1995 = vunpack.c.l.b16 %v1900
    %v1996 = vunpack.c.h.b16 %v1900
    %v1997 = vpack.c.b16 %v1935, %v1933
    %v1998 = vpack.c.b16 %v1936, %v1934
    %v1999 = vpack.c.b16 %v1939, %v1937
    %v2000 = vpack.c.b16 %v1940, %v1938
    %v2001 = vpack.c.b16 %v1943, %v1941
    %v2002 = vpack.c.b16 %v1944, %v1942
    %v2003 = vpack.c.b16 %v1947, %v1945
    %v2004 = vpack.c.b16 %v1948, %v1946
    %v2005 = vpack.c.b16 %v1951, %v1949
    %v2006 = vpack.c.b16 %v1952, %v1950
    %v2007 = vpack.c.b16 %v1955, %v1953
    %v2008 = vpack.c.b16 %v1956, %v1954
    %v2009 = vpack.c.b16 %v1959, %v1957
    %v2010 = vpack.c.b16 %v1960, %v1958
    %v2011 = vpack.c.b16 %v1963, %v1961
    %v2012 = vpack.c.b16 %v1964, %v1962
    %v2013 = vpack.c.b16 %v1967, %v1965
    %v2014 = vpack.c.b16 %v1968, %v1966
    %v2015 = vpack.c.b16 %v1971, %v1969
    %v2016 = vpack.c.b16 %v1972, %v1970
    %v2017 = vpack.c.b16 %v1975, %v1973
    %v2018 = vpack.c.b16 %v1976, %v1974
    %v2019 = vpack.c.b16 %v1979, %v1977
    %v2020 = vpack.c.b16 %v1980, %v1978
    %v2021 = vpack.c.b16 %v1983, %v1981
    %v2022 = vpack.c.b16 %v1984, %v1982
    %v2023 = vpack.c.b16 %v1987, %v1985
    %v2024 = vpack.c.b16 %v1988, %v1986
    %v2025 = vpack.c.b16 %v1991, %v1989
    %v2026 = vpack.c.b16 %v1992, %v1990
    %v2027 = vpack.c.b16 %v1995, %v1993
    %v2028 = vpack.c.b16 %v1996, %v1994
    %2061 = vmatprep.subr.bf16.mxu0 %v1998
    %2062 = vmatpush1.bf16.msra.mxu0 %v1997
    %2063 = vmatprep.subr.bf16.mxu0 %v2000
    %2064 = vmatpush1.bf16.msra.mxu0 %v1999
    %2065 = vmatprep.subr.bf16.mxu0 %v2002
    %2066 = vmatpush1.bf16.msra.mxu0 %v2001
    %2067 = vmatprep.subr.bf16.mxu0 %v2004
    %2068 = vmatpush1.bf16.msra.mxu0 %v2003
    %2069 = vmatprep.subr.bf16.mxu0 %v2006
    %2070 = vmatpush1.bf16.msra.mxu0 %v2005
    %2071 = vmatprep.subr.bf16.mxu0 %v2008
    %2072 = vmatpush1.bf16.msra.mxu0 %v2007
    %2073 = vmatprep.subr.bf16.mxu0 %v2010
    %2074 = vmatpush1.bf16.msra.mxu0 %v2009
    %2075 = vmatprep.subr.bf16.mxu0 %v2012
    %2076 = vmatpush1.bf16.msra.mxu0 %v2011
    %2077 = vmatprep.subr.bf16.mxu0 %v2014
    %2078 = vmatpush1.bf16.msra.mxu0 %v2013
    %2079 = vmatprep.subr.bf16.mxu0 %v2016
    %2080 = vmatpush1.bf16.msra.mxu0 %v2015
    %2081 = vmatprep.subr.bf16.mxu0 %v2018
    %2082 = vmatpush1.bf16.msra.mxu0 %v2017
    %2083 = vmatprep.subr.bf16.mxu0 %v2020
    %2084 = vmatpush1.bf16.msra.mxu0 %v2019
    %2085 = vmatprep.subr.bf16.mxu0 %v2022
    %2086 = vmatpush1.bf16.msra.mxu0 %v2021
    %2087 = vmatprep.subr.bf16.mxu0 %v2024
    %2088 = vmatpush1.bf16.msra.mxu0 %v2023
    %2089 = vmatprep.subr.bf16.mxu0 %v2026
    %2090 = vmatpush1.bf16.msra.mxu0 %v2025
    %2091 = vmatprep.subr.bf16.mxu0 %v2028
    %2092 = vmatpush1.bf16.msra.mxu0 %v2027
    %2093 = vmatprep.mubr.bf16.mxu0 %v1854
    %2094 = vmatmul.mubr.bf16.gmra.mrb[0].mxu0 %v1853
    %v2095 = vpop.f32.mrb[0].mxu0
    %v2096 = vadd.f32 0.0, %v2095
    %v2097 = vpop.f32.mrb[0].mxu0
    %v2098 = vadd.f32 0.0, %v2097
    %v2099 = vpop.f32.mrb[0].mxu0
    %v2100 = vadd.f32 0.0, %v2099
    %v2101 = vpop.f32.mrb[0].mxu0
    %v2102 = vadd.f32 0.0, %v2101
    %2103 = vmatprep.mubr.bf16.mxu0 %v1856
    %2104 = vmatmul.mubr.bf16.gmra.mrb[0].mxu0 %v1855
    %v2105 = vpop.f32.mrb[0].mxu0
    %v2106 = vadd.f32 0.0, %v2105
    %v2107 = vpop.f32.mrb[0].mxu0
    %v2108 = vadd.f32 0.0, %v2107
    %v2109 = vpop.f32.mrb[0].mxu0
    %v2110 = vadd.f32 0.0, %v2109
    %v2111 = vpop.f32.mrb[0].mxu0
    %v2112 = vadd.f32 0.0, %v2111
    %2113 = vmatprep.mubr.bf16.mxu0 %v1858
    %2114 = vmatmul.mubr.bf16.gmra.mrb[0].mxu0 %v1857
    %v2115 = vpop.f32.mrb[0].mxu0
    %v2116 = vadd.f32 0.0, %v2115
    %v2117 = vpop.f32.mrb[0].mxu0
    %v2118 = vadd.f32 0.0, %v2117
    %v2119 = vpop.f32.mrb[0].mxu0
    %v2120 = vadd.f32 0.0, %v2119
    %v2121 = vpop.f32.mrb[0].mxu0
    %v2122 = vadd.f32 0.0, %v2121
    %2123 = vmatprep.mubr.bf16.mxu0 %v1860
    %2124 = vmatmul.mubr.bf16.gmra.mrb[0].mxu0 %v1859
    %v2125 = vpop.f32.mrb[0].mxu0
    %v2126 = vadd.f32 0.0, %v2125
    %v2127 = vpop.f32.mrb[0].mxu0
    %v2128 = vadd.f32 0.0, %v2127
    %v2129 = vpop.f32.mrb[0].mxu0
    %v2130 = vadd.f32 0.0, %v2129
    %v2131 = vpop.f32.mrb[0].mxu0
    %v2132 = vadd.f32 0.0, %v2131
    %2133 = vmatprep.mubr.bf16.mxu0 %v1862
    %2134 = vmatmul.mubr.bf16.gmra.mrb[0].mxu0 %v1861
    %v2135 = vpop.f32.mrb[0].mxu0
    %v2136 = vadd.f32 0.0, %v2135
    %v2137 = vpop.f32.mrb[0].mxu0
    %v2138 = vadd.f32 0.0, %v2137
    %v2139 = vpop.f32.mrb[0].mxu0
    %v2140 = vadd.f32 0.0, %v2139
    %v2141 = vpop.f32.mrb[0].mxu0
    %v2142 = vadd.f32 0.0, %v2141
    %2143 = vmatprep.mubr.bf16.mxu0 %v1864
    %2144 = vmatmul.mubr.bf16.gmra.mrb[0].mxu0 %v1863
    %v2145 = vpop.f32.mrb[0].mxu0
    %v2146 = vadd.f32 0.0, %v2145
    %v2147 = vpop.f32.mrb[0].mxu0
    %v2148 = vadd.f32 0.0, %v2147
    %v2149 = vpop.f32.mrb[0].mxu0
    %v2150 = vadd.f32 0.0, %v2149
    %v2151 = vpop.f32.mrb[0].mxu0
    %v2152 = vadd.f32 0.0, %v2151
    %2153 = vmatprep.mubr.bf16.mxu0 %v1866
    %2154 = vmatmul.mubr.bf16.gmra.mrb[0].mxu0 %v1865
    %v2155 = vpop.f32.mrb[0].mxu0
    %v2156 = vadd.f32 0.0, %v2155
    %v2157 = vpop.f32.mrb[0].mxu0
    %v2158 = vadd.f32 0.0, %v2157
    %v2159 = vpop.f32.mrb[0].mxu0
    %v2160 = vadd.f32 0.0, %v2159
    %v2161 = vpop.f32.mrb[0].mxu0
    %v2162 = vadd.f32 0.0, %v2161
    %2163 = vmatprep.mubr.bf16.mxu0 %v1868
    %2164 = vmatmul.mubr.bf16.gmra.mrb[0].mxu0 %v1867
    %v2165 = vpop.f32.mrb[0].mxu0
    %v2166 = vadd.f32 0.0, %v2165
    %v2167 = vpop.f32.mrb[0].mxu0
    %v2168 = vadd.f32 0.0, %v2167
    %v2169 = vpop.f32.mrb[0].mxu0
    %v2170 = vadd.f32 0.0, %v2169
    %v2171 = vpop.f32.mrb[0].mxu0
    %v2172 = vadd.f32 0.0, %v2171
    %2173 = vdwg.mxu0
    %v2174 = vpack.c.bf16 %v2100, %v2096
    %v2175 = vpack.c.bf16 %v2102, %v2098
    %v2176 = vpack.c.bf16 %v2110, %v2106
    %v2177 = vpack.c.bf16 %v2112, %v2108
    %v2178 = vpack.c.bf16 %v2120, %v2116
    %v2179 = vpack.c.bf16 %v2122, %v2118
    %v2180 = vpack.c.bf16 %v2130, %v2126
    %v2181 = vpack.c.bf16 %v2132, %v2128
    %v2182 = vpack.c.bf16 %v2140, %v2136
    %v2183 = vpack.c.bf16 %v2142, %v2138
    %v2184 = vpack.c.bf16 %v2150, %v2146
    %v2185 = vpack.c.bf16 %v2152, %v2148
    %v2186 = vpack.c.bf16 %v2160, %v2156
    %v2187 = vpack.c.bf16 %v2162, %v2158
    %v2188 = vpack.c.bf16 %v2170, %v2166
    %v2189 = vpack.c.bf16 %v2172, %v2168
    %v2190 = vshrl.u32 %v1242, 16
    %v2191 = vpack.i.b16 %v2190, %v2190
    %v2193 = vlaneseq
    %v2194 = vshrl.u32 %v2193, 7
    %v2195 = vsub.s32 0, %v2194
    %v2196 = vrot.slane %v2191, %v2195
    %v2197 = vshrl.u32 %v1243, 16
    %v2198 = vpack.i.b16 %v2197, %v2197
    %v2200 = vlaneseq
    %v2201 = vshrl.u32 %v2200, 7
    %v2202 = vsub.s32 0, %v2201
    %v2203 = vrot.slane %v2198, %v2202
    %v2204 = vadd.bf16 %v2174, %v2196
    %v2205 = vadd.bf16 %v2175, %v2203
    %v2206 = vadd.bf16 %v2176, %v2196
    %v2207 = vadd.bf16 %v2177, %v2203
    %v2208 = vadd.bf16 %v2178, %v2196
    %v2209 = vadd.bf16 %v2179, %v2203
    %v2210 = vadd.bf16 %v2180, %v2196
    %v2211 = vadd.bf16 %v2181, %v2203
    %v2212 = vadd.bf16 %v2182, %v2196
    %v2213 = vadd.bf16 %v2183, %v2203
    %v2214 = vadd.bf16 %v2184, %v2196
    %v2215 = vadd.bf16 %v2185, %v2203
    %v2216 = vadd.bf16 %v2186, %v2196
    %v2217 = vadd.bf16 %v2187, %v2203
    %v2218 = vadd.bf16 %v2188, %v2196
    %v2219 = vadd.bf16 %v2189, %v2203
    %v2220 = vadd.bf16 %v2204, %v822
    %v2221 = vadd.bf16 %v2205, %v823
    %v2222 = vadd.bf16 %v2206, %v832
    %v2223 = vadd.bf16 %v2207, %v833
    %v2224 = vadd.bf16 %v2208, %v842
    %v2225 = vadd.bf16 %v2209, %v843
    %v2226 = vadd.bf16 %v2210, %v852
    %v2227 = vadd.bf16 %v2211, %v853
    %v2228 = vadd.bf16 %v2212, %v862
    %v2229 = vadd.bf16 %v2213, %v863
    %v2230 = vadd.bf16 %v2214, %v872
    %v2231 = vadd.bf16 %v2215, %v873
    %v2232 = vadd.bf16 %v2216, %v882
    %v2233 = vadd.bf16 %v2217, %v883
    %v2234 = vadd.bf16 %v2218, %v892
    %v2235 = vadd.bf16 %v2219, %v893
    %v2236 = vmax.bf16 %v2220, 0
    %v2237 = vmax.bf16 %v2221, 0
    %v2238 = vmax.bf16 %v2222, 0
    %v2239 = vmax.bf16 %v2223, 0
    %v2240 = vmax.bf16 %v2224, 0
    %v2241 = vmax.bf16 %v2225, 0
    %v2242 = vmax.bf16 %v2226, 0
    %v2243 = vmax.bf16 %v2227, 0
    %v2244 = vmax.bf16 %v2228, 0
    %v2245 = vmax.bf16 %v2229, 0
    %v2246 = vmax.bf16 %v2230, 0
    %v2247 = vmax.bf16 %v2231, 0
    %v2248 = vmax.bf16 %v2232, 0
    %v2249 = vmax.bf16 %v2233, 0
    %v2250 = vmax.bf16 %v2234, 0
    %v2251 = vmax.bf16 %v2235, 0
    %v2252 = vld [vmem:[#allocation6] sm:$0xff]
    %v2253 = vld [vmem:[#allocation6 + $0x8] sm:$0xff]
    %v2254 = vld [vmem:[#allocation6 + $0x10] sm:$0xff]
    %v2255 = vld [vmem:[#allocation6 + $0x18] sm:$0xff]
    %v2256 = vld [vmem:[#allocation6 + $0x20] sm:$0xff]
    %v2257 = vld [vmem:[#allocation6 + $0x28] sm:$0xff]
    %v2258 = vld [vmem:[#allocation6 + $0x30] sm:$0xff]
    %v2259 = vld [vmem:[#allocation6 + $0x38] sm:$0xff]
    %v2260 = vld [vmem:[#allocation6 + $0x40] sm:$0xff]
    %v2261 = vld [vmem:[#allocation6 + $0x48] sm:$0xff]
    %v2262 = vld [vmem:[#allocation6 + $0x50] sm:$0xff]
    %v2263 = vld [vmem:[#allocation6 + $0x58] sm:$0xff]
    %v2264 = vld [vmem:[#allocation6 + $0x60] sm:$0xff]
    %v2265 = vld [vmem:[#allocation6 + $0x68] sm:$0xff]
    %v2266 = vld [vmem:[#allocation6 + $0x70] sm:$0xff]
    %v2267 = vld [vmem:[#allocation6 + $0x78] sm:$0xff]
    %v2268 = vld [vmem:[#allocation6 + $0x80] sm:$0xff]
    %v2269 = vld [vmem:[#allocation6 + $0x88] sm:$0xff]
    %v2270 = vld [vmem:[#allocation6 + $0x90] sm:$0xff]
    %v2271 = vld [vmem:[#allocation6 + $0x98] sm:$0xff]
    %v2272 = vld [vmem:[#allocation6 + $0xa0] sm:$0xff]
    %v2273 = vld [vmem:[#allocation6 + $0xa8] sm:$0xff]
    %v2274 = vld [vmem:[#allocation6 + $0xb0] sm:$0xff]
    %v2275 = vld [vmem:[#allocation6 + $0xb8] sm:$0xff]
    %v2276 = vld [vmem:[#allocation6 + $0xc0] sm:$0xff]
    %v2277 = vld [vmem:[#allocation6 + $0xc8] sm:$0xff]
    %v2278 = vld [vmem:[#allocation6 + $0xd0] sm:$0xff]
    %v2279 = vld [vmem:[#allocation6 + $0xd8] sm:$0xff]
    %v2280 = vld [vmem:[#allocation6 + $0xe0] sm:$0xff]
    %v2281 = vld [vmem:[#allocation6 + $0xe8] sm:$0xff]
    %v2282 = vld [vmem:[#allocation6 + $0xf0] sm:$0xff]
    %v2283 = vld [vmem:[#allocation6 + $0xf8] sm:$0xff]
    %v2316 = vunpack.c.l.b16 %v2252
    %v2317 = vunpack.c.h.b16 %v2252
    %v2318 = vunpack.c.l.b16 %v2253
    %v2319 = vunpack.c.h.b16 %v2253
    %v2320 = vunpack.c.l.b16 %v2254
    %v2321 = vunpack.c.h.b16 %v2254
    %v2322 = vunpack.c.l.b16 %v2255
    %v2323 = vunpack.c.h.b16 %v2255
    %v2324 = vunpack.c.l.b16 %v2256
    %v2325 = vunpack.c.h.b16 %v2256
    %v2326 = vunpack.c.l.b16 %v2257
    %v2327 = vunpack.c.h.b16 %v2257
    %v2328 = vunpack.c.l.b16 %v2258
    %v2329 = vunpack.c.h.b16 %v2258
    %v2330 = vunpack.c.l.b16 %v2259
    %v2331 = vunpack.c.h.b16 %v2259
    %v2332 = vunpack.c.l.b16 %v2260
    %v2333 = vunpack.c.h.b16 %v2260
    %v2334 = vunpack.c.l.b16 %v2261
    %v2335 = vunpack.c.h.b16 %v2261
    %v2336 = vunpack.c.l.b16 %v2262
    %v2337 = vunpack.c.h.b16 %v2262
    %v2338 = vunpack.c.l.b16 %v2263
    %v2339 = vunpack.c.h.b16 %v2263
    %v2340 = vunpack.c.l.b16 %v2264
    %v2341 = vunpack.c.h.b16 %v2264
    %v2342 = vunpack.c.l.b16 %v2265
    %v2343 = vunpack.c.h.b16 %v2265
    %v2344 = vunpack.c.l.b16 %v2266
    %v2345 = vunpack.c.h.b16 %v2266
    %v2346 = vunpack.c.l.b16 %v2267
    %v2347 = vunpack.c.h.b16 %v2267
    %v2348 = vunpack.c.l.b16 %v2268
    %v2349 = vunpack.c.h.b16 %v2268
    %v2350 = vunpack.c.l.b16 %v2269
    %v2351 = vunpack.c.h.b16 %v2269
    %v2352 = vunpack.c.l.b16 %v2270
    %v2353 = vunpack.c.h.b16 %v2270
    %v2354 = vunpack.c.l.b16 %v2271
    %v2355 = vunpack.c.h.b16 %v2271
    %v2356 = vunpack.c.l.b16 %v2272
    %v2357 = vunpack.c.h.b16 %v2272
    %v2358 = vunpack.c.l.b16 %v2273
    %v2359 = vunpack.c.h.b16 %v2273
    %v2360 = vunpack.c.l.b16 %v2274
    %v2361 = vunpack.c.h.b16 %v2274
    %v2362 = vunpack.c.l.b16 %v2275
    %v2363 = vunpack.c.h.b16 %v2275
    %v2364 = vunpack.c.l.b16 %v2276
    %v2365 = vunpack.c.h.b16 %v2276
    %v2366 = vunpack.c.l.b16 %v2277
    %v2367 = vunpack.c.h.b16 %v2277
    %v2368 = vunpack.c.l.b16 %v2278
    %v2369 = vunpack.c.h.b16 %v2278
    %v2370 = vunpack.c.l.b16 %v2279
    %v2371 = vunpack.c.h.b16 %v2279
    %v2372 = vunpack.c.l.b16 %v2280
    %v2373 = vunpack.c.h.b16 %v2280
    %v2374 = vunpack.c.l.b16 %v2281
    %v2375 = vunpack.c.h.b16 %v2281
    %v2376 = vunpack.c.l.b16 %v2282
    %v2377 = vunpack.c.h.b16 %v2282
    %v2378 = vunpack.c.l.b16 %v2283
    %v2379 = vunpack.c.h.b16 %v2283
    %v2380 = vpack.c.b16 %v2318, %v2316
    %v2381 = vpack.c.b16 %v2319, %v2317
    %v2382 = vpack.c.b16 %v2322, %v2320
    %v2383 = vpack.c.b16 %v2323, %v2321
    %v2384 = vpack.c.b16 %v2326, %v2324
    %v2385 = vpack.c.b16 %v2327, %v2325
    %v2386 = vpack.c.b16 %v2330, %v2328
    %v2387 = vpack.c.b16 %v2331, %v2329
    %v2388 = vpack.c.b16 %v2334, %v2332
    %v2389 = vpack.c.b16 %v2335, %v2333
    %v2390 = vpack.c.b16 %v2338, %v2336
    %v2391 = vpack.c.b16 %v2339, %v2337
    %v2392 = vpack.c.b16 %v2342, %v2340
    %v2393 = vpack.c.b16 %v2343, %v2341
    %v2394 = vpack.c.b16 %v2346, %v2344
    %v2395 = vpack.c.b16 %v2347, %v2345
    %v2396 = vpack.c.b16 %v2350, %v2348
    %v2397 = vpack.c.b16 %v2351, %v2349
    %v2398 = vpack.c.b16 %v2354, %v2352
    %v2399 = vpack.c.b16 %v2355, %v2353
    %v2400 = vpack.c.b16 %v2358, %v2356
    %v2401 = vpack.c.b16 %v2359, %v2357
    %v2402 = vpack.c.b16 %v2362, %v2360
    %v2403 = vpack.c.b16 %v2363, %v2361
    %v2404 = vpack.c.b16 %v2366, %v2364
    %v2405 = vpack.c.b16 %v2367, %v2365
    %v2406 = vpack.c.b16 %v2370, %v2368
    %v2407 = vpack.c.b16 %v2371, %v2369
    %v2408 = vpack.c.b16 %v2374, %v2372
    %v2409 = vpack.c.b16 %v2375, %v2373
    %v2410 = vpack.c.b16 %v2378, %v2376
    %v2411 = vpack.c.b16 %v2379, %v2377
    %2444 = vmatprep.subr.bf16.mxu0 %v2381
    %2445 = vmatpush1.bf16.msra.mxu0 %v2380
    %2446 = vmatprep.subr.bf16.mxu0 %v2383
    %2447 = vmatpush1.bf16.msra.mxu0 %v2382
    %2448 = vmatprep.subr.bf16.mxu0 %v2385
    %2449 = vmatpush1.bf16.msra.mxu0 %v2384
    %2450 = vmatprep.subr.bf16.mxu0 %v2387
    %2451 = vmatpush1.bf16.msra.mxu0 %v2386
    %2452 = vmatprep.subr.bf16.mxu0 %v2389
    %2453 = vmatpush1.bf16.msra.mxu0 %v2388
    %2454 = vmatprep.subr.bf16.mxu0 %v2391
    %2455 = vmatpush1.bf16.msra.mxu0 %v2390
    %2456 = vmatprep.subr.bf16.mxu0 %v2393
    %2457 = vmatpush1.bf16.msra.mxu0 %v2392
    %2458 = vmatprep.subr.bf16.mxu0 %v2395
    %2459 = vmatpush1.bf16.msra.mxu0 %v2394
    %2460 = vmatprep.subr.bf16.mxu0 %v2397
    %2461 = vmatpush1.bf16.msra.mxu0 %v2396
    %2462 = vmatprep.subr.bf16.mxu0 %v2399
    %2463 = vmatpush1.bf16.msra.mxu0 %v2398
    %2464 = vmatprep.subr.bf16.mxu0 %v2401
    %2465 = vmatpush1.bf16.msra.mxu0 %v2400
    %2466 = vmatprep.subr.bf16.mxu0 %v2403
    %2467 = vmatpush1.bf16.msra.mxu0 %v2402
    %2468 = vmatprep.subr.bf16.mxu0 %v2405
    %2469 = vmatpush1.bf16.msra.mxu0 %v2404
    %2470 = vmatprep.subr.bf16.mxu0 %v2407
    %2471 = vmatpush1.bf16.msra.mxu0 %v2406
    %2472 = vmatprep.subr.bf16.mxu0 %v2409
    %2473 = vmatpush1.bf16.msra.mxu0 %v2408
    %2474 = vmatprep.subr.bf16.mxu0 %v2411
    %2475 = vmatpush1.bf16.msra.mxu0 %v2410
    %2476 = vmatprep.mubr.bf16.mxu0 %v2237
    %2477 = vmatmul.mubr.bf16.gmra.mrb[0].mxu0 %v2236
    %v2478 = vpop.f32.mrb[0].mxu0
    %v2479 = vadd.f32 0.0, %v2478
    %v2480 = vpop.f32.mrb[0].mxu0
    %v2481 = vadd.f32 0.0, %v2480
    %v2482 = vpop.f32.mrb[0].mxu0
    %v2483 = vadd.f32 0.0, %v2482
    %v2484 = vpop.f32.mrb[0].mxu0
    %v2485 = vadd.f32 0.0, %v2484
    %2486 = vmatprep.mubr.bf16.mxu0 %v2239
    %2487 = vmatmul.mubr.bf16.gmra.mrb[0].mxu0 %v2238
    %v2488 = vpop.f32.mrb[0].mxu0
    %v2489 = vadd.f32 0.0, %v2488
    %v2490 = vpop.f32.mrb[0].mxu0
    %v2491 = vadd.f32 0.0, %v2490
    %v2492 = vpop.f32.mrb[0].mxu0
    %v2493 = vadd.f32 0.0, %v2492
    %v2494 = vpop.f32.mrb[0].mxu0
    %v2495 = vadd.f32 0.0, %v2494
    %2496 = vmatprep.mubr.bf16.mxu0 %v2241
    %2497 = vmatmul.mubr.bf16.gmra.mrb[0].mxu0 %v2240
    %v2498 = vpop.f32.mrb[0].mxu0
    %v2499 = vadd.f32 0.0, %v2498
    %v2500 = vpop.f32.mrb[0].mxu0
    %v2501 = vadd.f32 0.0, %v2500
    %v2502 = vpop.f32.mrb[0].mxu0
    %v2503 = vadd.f32 0.0, %v2502
    %v2504 = vpop.f32.mrb[0].mxu0
    %v2505 = vadd.f32 0.0, %v2504
    %2506 = vmatprep.mubr.bf16.mxu0 %v2243
    %2507 = vmatmul.mubr.bf16.gmra.mrb[0].mxu0 %v2242
    %v2508 = vpop.f32.mrb[0].mxu0
    %v2509 = vadd.f32 0.0, %v2508
    %v2510 = vpop.f32.mrb[0].mxu0
    %v2511 = vadd.f32 0.0, %v2510
    %v2512 = vpop.f32.mrb[0].mxu0
    %v2513 = vadd.f32 0.0, %v2512
    %v2514 = vpop.f32.mrb[0].mxu0
    %v2515 = vadd.f32 0.0, %v2514
    %2516 = vmatprep.mubr.bf16.mxu0 %v2245
    %2517 = vmatmul.mubr.bf16.gmra.mrb[0].mxu0 %v2244
    %v2518 = vpop.f32.mrb[0].mxu0
    %v2519 = vadd.f32 0.0, %v2518
    %v2520 = vpop.f32.mrb[0].mxu0
    %v2521 = vadd.f32 0.0, %v2520
    %v2522 = vpop.f32.mrb[0].mxu0
    %v2523 = vadd.f32 0.0, %v2522
    %v2524 = vpop.f32.mrb[0].mxu0
    %v2525 = vadd.f32 0.0, %v2524
    %2526 = vmatprep.mubr.bf16.mxu0 %v2247
    %2527 = vmatmul.mubr.bf16.gmra.mrb[0].mxu0 %v2246
    %v2528 = vpop.f32.mrb[0].mxu0
    %v2529 = vadd.f32 0.0, %v2528
    %v2530 = vpop.f32.mrb[0].mxu0
    %v2531 = vadd.f32 0.0, %v2530
    %v2532 = vpop.f32.mrb[0].mxu0
    %v2533 = vadd.f32 0.0, %v2532
    %v2534 = vpop.f32.mrb[0].mxu0
    %v2535 = vadd.f32 0.0, %v2534
    %2536 = vmatprep.mubr.bf16.mxu0 %v2249
    %2537 = vmatmul.mubr.bf16.gmra.mrb[0].mxu0 %v2248
    %v2538 = vpop.f32.mrb[0].mxu0
    %v2539 = vadd.f32 0.0, %v2538
    %v2540 = vpop.f32.mrb[0].mxu0
    %v2541 = vadd.f32 0.0, %v2540
    %v2542 = vpop.f32.mrb[0].mxu0
    %v2543 = vadd.f32 0.0, %v2542
    %v2544 = vpop.f32.mrb[0].mxu0
    %v2545 = vadd.f32 0.0, %v2544
    %2546 = vmatprep.mubr.bf16.mxu0 %v2251
    %2547 = vmatmul.mubr.bf16.gmra.mrb[0].mxu0 %v2250
    %v2548 = vpop.f32.mrb[0].mxu0
    %v2549 = vadd.f32 0.0, %v2548
    %v2550 = vpop.f32.mrb[0].mxu0
    %v2551 = vadd.f32 0.0, %v2550
    %v2552 = vpop.f32.mrb[0].mxu0
    %v2553 = vadd.f32 0.0, %v2552
    %v2554 = vpop.f32.mrb[0].mxu0
    %v2555 = vadd.f32 0.0, %v2554
    %2556 = vdwg.mxu0
    %v2557 = vpack.c.bf16 %v2483, %v2479
    %v2558 = vpack.c.bf16 %v2485, %v2481
    %v2559 = vpack.c.bf16 %v2493, %v2489
    %v2560 = vpack.c.bf16 %v2495, %v2491
    %v2561 = vpack.c.bf16 %v2503, %v2499
    %v2562 = vpack.c.bf16 %v2505, %v2501
    %v2563 = vpack.c.bf16 %v2513, %v2509
    %v2564 = vpack.c.bf16 %v2515, %v2511
    %v2565 = vpack.c.bf16 %v2523, %v2519
    %v2566 = vpack.c.bf16 %v2525, %v2521
    %v2567 = vpack.c.bf16 %v2533, %v2529
    %v2568 = vpack.c.bf16 %v2535, %v2531
    %v2569 = vpack.c.bf16 %v2543, %v2539
    %v2570 = vpack.c.bf16 %v2545, %v2541
    %v2571 = vpack.c.bf16 %v2553, %v2549
    %v2572 = vpack.c.bf16 %v2555, %v2551
    %v2573 = vlaneseq
    %v2574 = vshrl.u32 %v2573, 7
    %v2575 = vsub.s32 1, %v2574
    %v2576 = vrot.slane %v1245, %v2575
    %v2577 = vlaneseq
    %v2578 = vshrl.u32 %v2577, 7
    %v2579 = vsub.s32 1, %v2578
    %v2580 = vrot.slane %v1252, %v2579
    %v2581 = vadd.bf16 %v2557, %v2576
    %v2582 = vadd.bf16 %v2558, %v2580
    %v2583 = vadd.bf16 %v2559, %v2576
    %v2584 = vadd.bf16 %v2560, %v2580
    %v2585 = vadd.bf16 %v2561, %v2576
    %v2586 = vadd.bf16 %v2562, %v2580
    %v2587 = vadd.bf16 %v2563, %v2576
    %v2588 = vadd.bf16 %v2564, %v2580
    %v2589 = vadd.bf16 %v2565, %v2576
    %v2590 = vadd.bf16 %v2566, %v2580
    %v2591 = vadd.bf16 %v2567, %v2576
    %v2592 = vadd.bf16 %v2568, %v2580
    %v2593 = vadd.bf16 %v2569, %v2576
    %v2594 = vadd.bf16 %v2570, %v2580
    %v2595 = vadd.bf16 %v2571, %v2576
    %v2596 = vadd.bf16 %v2572, %v2580
    %v2597 = vmax.bf16 %v2581, 0
    %v2598 = vmax.bf16 %v2582, 0
    %v2599 = vmax.bf16 %v2583, 0
    %v2600 = vmax.bf16 %v2584, 0
    %v2601 = vmax.bf16 %v2585, 0
    %v2602 = vmax.bf16 %v2586, 0
    %v2603 = vmax.bf16 %v2587, 0
    %v2604 = vmax.bf16 %v2588, 0
    %v2605 = vmax.bf16 %v2589, 0
    %v2606 = vmax.bf16 %v2590, 0
    %v2607 = vmax.bf16 %v2591, 0
    %v2608 = vmax.bf16 %v2592, 0
    %v2609 = vmax.bf16 %v2593, 0
    %v2610 = vmax.bf16 %v2594, 0
    %v2611 = vmax.bf16 %v2595, 0
    %v2612 = vmax.bf16 %v2596, 0
    %v2613 = vlaneseq
    %v2614 = vshrl.u32 %v2613, 7
    %v2615 = vsub.s32 1, %v2614
    %v2616 = vrot.slane %v2191, %v2615
    %v2617 = vlaneseq
    %v2618 = vshrl.u32 %v2617, 7
    %v2619 = vsub.s32 1, %v2618
    %v2620 = vrot.slane %v2198, %v2619
    %v2621 = vmul.bf16 %v2597, %v2616
    %v2622 = vmul.bf16 %v2598, %v2620
    %v2623 = vmul.bf16 %v2599, %v2616
    %v2624 = vmul.bf16 %v2600, %v2620
    %v2625 = vmul.bf16 %v2601, %v2616
    %v2626 = vmul.bf16 %v2602, %v2620
    %v2627 = vmul.bf16 %v2603, %v2616
    %v2628 = vmul.bf16 %v2604, %v2620
    %v2629 = vmul.bf16 %v2605, %v2616
    %v2630 = vmul.bf16 %v2606, %v2620
    %v2631 = vmul.bf16 %v2607, %v2616
    %v2632 = vmul.bf16 %v2608, %v2620
    %v2633 = vmul.bf16 %v2609, %v2616
    %v2634 = vmul.bf16 %v2610, %v2620
    %v2635 = vmul.bf16 %v2611, %v2616
    %v2636 = vmul.bf16 %v2612, %v2620
    %v2637 = vunpack.c.l.bf16 %v2621
    %v2638 = vunpack.c.l.bf16 %v2622
    %v2639 = vunpack.c.h.bf16 %v2621
    %v2640 = vunpack.c.h.bf16 %v2622
    %v2641 = vunpack.c.l.bf16 %v2623
    %v2642 = vunpack.c.l.bf16 %v2624
    %v2643 = vunpack.c.h.bf16 %v2623
    %v2644 = vunpack.c.h.bf16 %v2624
    %v2645 = vunpack.c.l.bf16 %v2625
    %v2646 = vunpack.c.l.bf16 %v2626
    %v2647 = vunpack.c.h.bf16 %v2625
    %v2648 = vunpack.c.h.bf16 %v2626
    %v2649 = vunpack.c.l.bf16 %v2627
    %v2650 = vunpack.c.l.bf16 %v2628
    %v2651 = vunpack.c.h.bf16 %v2627
    %v2652 = vunpack.c.h.bf16 %v2628
    %v2653 = vunpack.c.l.bf16 %v2629
    %v2654 = vunpack.c.l.bf16 %v2630
    %v2655 = vunpack.c.h.bf16 %v2629
    %v2656 = vunpack.c.h.bf16 %v2630
    %v2657 = vunpack.c.l.bf16 %v2631
    %v2658 = vunpack.c.l.bf16 %v2632
    %v2659 = vunpack.c.h.bf16 %v2631
    %v2660 = vunpack.c.h.bf16 %v2632
    %v2661 = vunpack.c.l.bf16 %v2633
    %v2662 = vunpack.c.l.bf16 %v2634
    %v2663 = vunpack.c.h.bf16 %v2633
    %v2664 = vunpack.c.h.bf16 %v2634
    %v2665 = vunpack.c.l.bf16 %v2635
    %v2666 = vunpack.c.l.bf16 %v2636
    %v2667 = vunpack.c.h.bf16 %v2635
    %v2668 = vunpack.c.h.bf16 %v2636
    %v2669 = vadd.f32 %v2637, %v2638
    %2670 = vadd.xlane.f32.xlu0 %v2669
    %v2671 = vpop.xlane.xlu0 %2670
    %v2672 = vadd.f32 %v2639, %v2640
    %2673 = vadd.xlane.f32.xlu0 %v2672
    %v2674 = vpop.xlane.xlu0 %2673
    %v2675 = vadd.f32 %v2641, %v2642
    %2676 = vadd.xlane.f32.xlu0 %v2675
    %v2677 = vpop.xlane.xlu0 %2676
    %v2678 = vadd.f32 %v2643, %v2644
    %2679 = vadd.xlane.f32.xlu0 %v2678
    %v2680 = vpop.xlane.xlu0 %2679
    %v2681 = vadd.f32 %v2645, %v2646
    %2682 = vadd.xlane.f32.xlu0 %v2681
    %v2683 = vpop.xlane.xlu0 %2682
    %v2684 = vadd.f32 %v2647, %v2648
    %2685 = vadd.xlane.f32.xlu0 %v2684
    %v2686 = vpop.xlane.xlu0 %2685
    %v2687 = vadd.f32 %v2649, %v2650
    %2688 = vadd.xlane.f32.xlu0 %v2687
    %v2689 = vpop.xlane.xlu0 %2688
    %v2690 = vadd.f32 %v2651, %v2652
    %2691 = vadd.xlane.f32.xlu0 %v2690
    %v2692 = vpop.xlane.xlu0 %2691
    %v2693 = vadd.f32 %v2653, %v2654
    %2694 = vadd.xlane.f32.xlu0 %v2693
    %v2695 = vpop.xlane.xlu0 %2694
    %v2696 = vadd.f32 %v2655, %v2656
    %2697 = vadd.xlane.f32.xlu0 %v2696
    %v2698 = vpop.xlane.xlu0 %2697
    %v2699 = vadd.f32 %v2657, %v2658
    %2700 = vadd.xlane.f32.xlu0 %v2699
    %v2701 = vpop.xlane.xlu0 %2700
    %v2702 = vadd.f32 %v2659, %v2660
    %2703 = vadd.xlane.f32.xlu0 %v2702
    %v2704 = vpop.xlane.xlu0 %2703
    %v2705 = vadd.f32 %v2661, %v2662
    %2706 = vadd.xlane.f32.xlu0 %v2705
    %v2707 = vpop.xlane.xlu0 %2706
    %v2708 = vadd.f32 %v2663, %v2664
    %2709 = vadd.xlane.f32.xlu0 %v2708
    %v2710 = vpop.xlane.xlu0 %2709
    %v2711 = vadd.f32 %v2665, %v2666
    %2712 = vadd.xlane.f32.xlu0 %v2711
    %v2713 = vpop.xlane.xlu0 %2712
    %v2714 = vadd.f32 %v2667, %v2668
    %2715 = vadd.xlane.f32.xlu0 %v2714
    %v2716 = vpop.xlane.xlu0 %2715
    %v2717 = vlaneseq
    %v2718 = vshrl.u32 %v2717, 7
    %v2719 = vsub.s32 4, %v2718
    %v2720 = vrot.slane %v66, %v2719
    %v2721 = vadd.f32 %v2671, %v2720
    %v2722 = vadd.f32 %v2674, %v2720
    %v2723 = vadd.f32 %v2677, %v2720
    %v2724 = vadd.f32 %v2680, %v2720
    %v2725 = vadd.f32 %v2683, %v2720
    %v2726 = vadd.f32 %v2686, %v2720
    %v2727 = vadd.f32 %v2689, %v2720
    %v2728 = vadd.f32 %v2692, %v2720
    %v2729 = vadd.f32 %v2695, %v2720
    %v2730 = vadd.f32 %v2698, %v2720
    %v2731 = vadd.f32 %v2701, %v2720
    %v2732 = vadd.f32 %v2704, %v2720
    %v2733 = vadd.f32 %v2707, %v2720
    %v2734 = vadd.f32 %v2710, %v2720
    %v2735 = vadd.f32 %v2713, %v2720
    %v2736 = vadd.f32 %v2716, %v2720
    %vm2737 = vcmask 7168
    %2738 = vst.msk [vmem:[%s6] sm:$0xff] %vm2737, %v2721
    %2739 = vst.msk [vmem:[%s6 + $0x8] sm:$0xff] %vm2737, %v2722
    %2740 = vst.msk [vmem:[%s6 + $0x10] sm:$0xff] %vm2737, %v2723
    %2741 = vst.msk [vmem:[%s6 + $0x18] sm:$0xff] %vm2737, %v2724
    %2742 = vst.msk [vmem:[%s6 + $0x20] sm:$0xff] %vm2737, %v2725
    %2743 = vst.msk [vmem:[%s6 + $0x28] sm:$0xff] %vm2737, %v2726
    %2744 = vst.msk [vmem:[%s6 + $0x30] sm:$0xff] %vm2737, %v2727
    %2745 = vst.msk [vmem:[%s6 + $0x38] sm:$0xff] %vm2737, %v2728
    %2746 = vst.msk [vmem:[%s6 + $0x40] sm:$0xff] %vm2737, %v2729
    %2747 = vst.msk [vmem:[%s6 + $0x48] sm:$0xff] %vm2737, %v2730
    %2748 = vst.msk [vmem:[%s6 + $0x50] sm:$0xff] %vm2737, %v2731
    %2749 = vst.msk [vmem:[%s6 + $0x58] sm:$0xff] %vm2737, %v2732
    %2750 = vst.msk [vmem:[%s6 + $0x60] sm:$0xff] %vm2737, %v2733
    %2751 = vst.msk [vmem:[%s6 + $0x68] sm:$0xff] %vm2737, %v2734
    %2752 = vst.msk [vmem:[%s6 + $0x70] sm:$0xff] %vm2737, %v2735
    %2753 = vst.msk [vmem:[%s6 + $0x78] sm:$0xff] %vm2737, %v2736
    // Predicated region
    $region38: #{tpu_custom_call.1} parent=1 // pred_check
      _
    $region39: #{tpu_custom_call.1} parent=1 // pred_check_branch
      %2755 = sbr.rel (0) target = $region41
    $region40: #{tpu_custom_call.1} parent=1 // pred_region
      _
    $region41: #{tpu_custom_call.1} parent=1 // pred_fallthru
      _
    // Predicated region
    $region42: #{tpu_custom_call.1} parent=1 // pred_check
      _
    $region43: #{tpu_custom_call.1} parent=1 // pred_check_branch
      %2757 = sbr.rel (0) target = $region45
    $region44: #{tpu_custom_call.1} parent=1 // pred_region
      _
    $region45: #{tpu_custom_call.1} parent=1 // pred_fallthru
      _
    %2758 = vsyncpa [#allocation3], 1
    %2759 = vsyncpa [#allocation5], 1

</llo_original>
